<compile_context>
chip_gen: v7x
topology: tpu7x:2x2x1
jax: 0.10.0
libtpu: 0.0.40
codegen_flags: <defaults>
</compile_context>

<pallas_src>
import math

import jax
import jax.numpy as jnp
from jax import lax
from jax.experimental import pallas as pl
from jax.experimental.pallas import tpu as pltpu

# --- constants mirroring the module's __init__ (deterministic, no params) ---
DICE_SMOOTH = 1e-5    # soft_dice_kwargs['smooth']
DICE_EPS = 1e-8       # nnU-Net SoftDiceLoss denominator eps
WEIGHT_CE = 1.0
WEIGHT_DICE = 1.0
LC_EPS = 1e-5         # dis_calculation eps
LC_ALPHA = 0.1        # LocalizationLoss.alpha  (L1 regularization weight)
DCLC_ALPHA = 0.01     # DC_and_LC_loss.alpha    (localization loss weight)


def _dc_lc_kernel(logits_ref, labels_ref, out_ref,
                  ce_sm, tp_sm, ps_sm, ys_sm, dimp_vmem, dimt_vmem):
    i = pl.program_id(0)
    last = pl.num_programs(0) - 1

    x = logits_ref[...].astype(jnp.float32)        # (N, C, TH, W) row tile
    lab0 = labels_ref[...][:, 0]                   # (N, TH, W) int32
    N, C, TH, W = x.shape
    H = dimp_vmem.shape[0]                         # full spatial H
    Kp = dimp_vmem.shape[1]                        # padded (C-1)*N columns
    K = N * (C - 1)

    # ----------------- init accumulators on the first grid step -------------
    @pl.when(i == 0)
    def _init():
        ce_sm[0] = jnp.float32(0.0)
        for c in range(C):
            tp_sm[c] = jnp.float32(0.0)
            ps_sm[c] = jnp.float32(0.0)
            ys_sm[c] = jnp.float32(0.0)

    # ----------------- pass A: fused channel max + argmax, then exp ---------
    best = x[:, 0]                                  # running max == softmax max
    idx = jnp.zeros(lab0.shape, dtype=jnp.int32)
    for c in range(1, C):
        upd = x[:, c] > best
        best = jnp.where(upd, x[:, c], best)
        idx = jnp.where(upd, c, idx)                # first-max tie break
    exps = []
    sumexp = None
    for c in range(C):
        e = jnp.exp(x[:, c] - best)
        exps.append(e)
        sumexp = e if sumexp is None else sumexp + e
    inv_sumexp = 1.0 / sumexp
    lse_sum = jnp.sum(best + jnp.log(sumexp))       # sum of log-sum-exp

    # ----------------- pass B: fused CE / soft-dice / localization ----------
    true_logit_sum = jnp.float32(0.0)
    rows_p = []
    rows_t = []
    for c in range(C):
        xc = x[:, c]
        y_b = lab0 == c
        y_f = y_b.astype(jnp.float32)
        true_logit_sum = true_logit_sum + jnp.sum(xc * y_f)
        if c >= 1:
            p_c = exps[c] * inv_sumexp
            tp_sm[c] = tp_sm[c] + jnp.sum(p_c * y_f)          # tp
            ps_sm[c] = ps_sm[c] + jnp.sum(p_c)                # tp + fp
            ys_sm[c] = ys_sm[c] + jnp.sum(y_f)                # tp + fn
            pred_b = idx == c
            fp_m = (pred_b & jnp.logical_not(y_b)).astype(jnp.float32)
            fn_m = (jnp.logical_not(pred_b) & y_b).astype(jnp.float32)
            rows_p.append(jnp.sum(xc * fp_m, axis=-1))        # (N, TH)
            rows_t.append(jnp.sum(fn_m, axis=-1))             # (N, TH)
    ce_sm[0] = ce_sm[0] + (lse_sum - true_logit_sum)

    # stash this tile's per-row localization sums into the (H, Kp) scratch;
    # padded columns stay exactly zero so they contribute nothing at finalize.
    if Kp > K:
        pad = jnp.zeros((Kp - K, TH), jnp.float32)
        rows_p.append(pad)
        rows_t.append(pad)
    dp_kt = jnp.concatenate(rows_p, axis=0)                   # (Kp, TH)
    dt_kt = jnp.concatenate(rows_t, axis=0)
    row0 = pl.multiple_of(i * TH, TH)
    dimp_vmem[pl.ds(row0, TH), :] = jnp.transpose(dp_kt)      # (TH, Kp)
    dimt_vmem[pl.ds(row0, TH), :] = jnp.transpose(dt_kt)

    # ----------------- finalize on the last grid step ------------------------
    @pl.when(i == last)
    def _finalize():
        # cross entropy (mean over N*H*W pixels)
        ce_loss = ce_sm[0] / jnp.float32(N * H * W)

        # soft dice, batch_dice=True, do_bg=False:
        #   2*tp + fp + fn == sum(p) + sum(y)
        dc_acc = jnp.float32(0.0)
        for c in range(1, C):
            num = 2.0 * tp_sm[c] + DICE_SMOOTH
            den = ps_sm[c] + ys_sm[c] + DICE_SMOOTH + DICE_EPS
            dc_acc = dc_acc + num / den
        dice_loss = -(dc_acc / jnp.float32(C - 1))

        # localization: single stacked cumsum-as-matmul over all (class, n)
        dp = dimp_vmem[...]                                   # (H, Kp)
        dt = dimt_vmem[...]
        sp = jnp.sum(dp, axis=0, keepdims=True)               # (1, Kp)
        st = jnp.sum(dt, axis=0, keepdims=True)
        diff = dp / (sp + LC_EPS) - dt / (st + LC_EPS)        # linearity of cumsum
        tri = (lax.broadcasted_iota(jnp.int32, (H, H), 0)
               >= lax.broadcasted_iota(jnp.int32, (H, H), 1)).astype(jnp.float32)
        cum = jnp.dot(tri, diff, preferred_element_type=jnp.float32)   # (H, Kp)
        dim_loss = (jnp.sum(jnp.abs(cum)) / jnp.float32(N * (C - 1) * H)
                    * math.sqrt(float(H)))
        l1_reg = (jnp.sum(jnp.abs(sp + st))
                  / jnp.float32(H * W) / jnp.float32(N * (C - 1)))
        lc_loss = dim_loss + LC_ALPHA * l1_reg

        out_ref[0] = (WEIGHT_CE * ce_loss + WEIGHT_DICE * dice_loss
                      + DCLC_ALPHA * lc_loss)


def _pick_row_tile(h):
    """Largest row tile <= 64 that is a multiple of 8 and divides H (else H)."""
    cands = [t for t in range(8, h, 8) if h % t == 0 and t <= 64]
    return max(cands) if cands else h


@jax.jit
def dc_and_lc_loss(logits, labels):
    """logits: (N, C, H, W) float32 or bfloat16; labels: (N, 1, H, W) int32."""
    N, C, H, W = logits.shape
    TH = _pick_row_tile(H)
    n_tiles = H // TH
    K = N * (C - 1)
    Kp = max(8, ((K + 7) // 8) * 8)

    out = pl.pallas_call(
        _dc_lc_kernel,
        grid=(n_tiles,),
        in_specs=[
            pl.BlockSpec((N, C, TH, W), lambda i: (0, 0, i, 0)),
            pl.BlockSpec((N, 1, TH, W), lambda i: (0, 0, i, 0)),
        ],
        out_specs=pl.BlockSpec((1,), lambda i: (0,),
                               memory_space=pltpu.MemorySpace.SMEM),
        out_shape=jax.ShapeDtypeStruct((1,), jnp.float32),
        scratch_shapes=[
            pltpu.SMEM((1,), jnp.float32),      # CE numerator sum
            pltpu.SMEM((C,), jnp.float32),      # per-class tp
            pltpu.SMEM((C,), jnp.float32),      # per-class sum(p)
            pltpu.SMEM((C,), jnp.float32),      # per-class sum(y)
            pltpu.VMEM((H, Kp), jnp.float32),   # dim_p rows (fp sums over W)
            pltpu.VMEM((H, Kp), jnp.float32),   # dim_t rows (fn sums over W)
        ],
        compiler_params=pltpu.CompilerParams(
            dimension_semantics=("arbitrary",),   # reduction axis, accumulators
            vmem_limit_bytes=32 * 1024 * 1024,
        ),
    )(logits, labels)
    return out[0]


def _reference(logits, labels):
    """Pure-JAX transcription of the PyTorch forward, for validation."""
    N, C, H, W = logits.shape
    y = jax.nn.one_hot(labels[:, 0], C, axis=1, dtype=jnp.float32)
    p = jax.nn.softmax(logits, axis=1)
    logp = jax.nn.log_softmax(logits, axis=1)
    ce = -jnp.mean(jnp.sum(y * logp, axis=1))
    tp = jnp.sum(p * y, axis=(0, 2, 3))
    fp = jnp.sum(p * (1.0 - y), axis=(0, 2, 3))
    fn = jnp.sum((1.0 - p) * y, axis=(0, 2, 3))
    dc = (2.0 * tp + DICE_SMOOTH) / (2.0 * tp + fp + fn + DICE_SMOOTH + DICE_EPS)
    dice = -jnp.mean(dc[1:])
    pred_oh = jax.nn.one_hot(jnp.argmax(logits, axis=1), C, axis=1, dtype=jnp.float32)
    fp_idx = ((pred_oh == 1) & (y == 0)).astype(jnp.float32)
    fn_idx = ((pred_oh == 0) & (y == 1)).astype(jnp.float32)
    fpv = logits * fp_idx
    fnv = y * fn_idx
    dim_p = jnp.sum(fpv[:, 1:], axis=-1)
    dim_t = jnp.sum(fnv[:, 1:], axis=-1)
    dist_p = jnp.cumsum(dim_p, -1) / (jnp.sum(dim_p, -1, keepdims=True) + LC_EPS)
    dist_t = jnp.cumsum(dim_t, -1) / (jnp.sum(dim_t, -1, keepdims=True) + LC_EPS)
    dim_loss = jnp.mean(jnp.abs(dist_p - dist_t)) * jnp.sqrt(jnp.float32(H))
    l1 = jnp.mean(jnp.abs(jnp.mean(fpv[:, 1:].reshape(N, C - 1, -1), -1)
                          + jnp.mean(fnv[:, 1:].reshape(N, C - 1, -1), -1)))
    lc = dim_loss + LC_ALPHA * l1
    return WEIGHT_CE * ce + WEIGHT_DICE * dice + DCLC_ALPHA * lc


if __name__ == "__main__":
    N, C, H, W = 2, 4, 16, 16
    key = jax.random.PRNGKey(0)
    k_logits, k_labels = jax.random.split(key)
    logits = jax.random.normal(k_logits, (N, C, H, W), dtype=jnp.float32)
    labels = jax.random.randint(k_labels, (N, 1, H, W), 0, C, dtype=jnp.int32)

    loss = dc_and_lc_loss(logits, labels)
    jax.block_until_ready(loss)

    ref = _reference(logits, labels)
    assert jnp.allclose(loss, ref, rtol=1e-4, atol=1e-5), (loss, ref)
    print("KERNEL_OK")
</pallas_src>

<mosaic_0001>
module attributes {stable_mosaic.version = 11 : i64} {
  func.func @_dc_lc_kernel(%arg0: i32, %arg1: memref<2x4x8x16xf32, #tpu.memory_space<vmem>>, %arg2: memref<2x1x8x16xi32, #tpu.memory_space<vmem>>, %arg3: memref<1xf32, #tpu.memory_space<smem>>, %arg4: memref<1xf32, #tpu.memory_space<smem>>, %arg5: memref<4xf32, #tpu.memory_space<smem>>, %arg6: memref<4xf32, #tpu.memory_space<smem>>, %arg7: memref<4xf32, #tpu.memory_space<smem>>, %arg8: memref<16x8xf32, #tpu.memory_space<vmem>>, %arg9: memref<16x8xf32, #tpu.memory_space<vmem>>) attributes {dimension_semantics = [#tpu.dimension_semantics<arbitrary>], iteration_bounds = array<i64: 2>, scalar_prefetch = 0 : i64, scratch_operands = 6 : i64, tpu.core_type = #tpu.core_type<tc>, window_params = [{transform_indices = @transform_0, window_bounds = array<i64: 2, 4, 8, 16>}, {transform_indices = @transform_1, window_bounds = array<i64: 2, 1, 8, 16>}, {transform_indices = @transform_2, window_bounds = array<i64: 1>}]} {
    %c0 = arith.constant 0 : index
    %c0_0 = arith.constant 0 : index
    %c0_1 = arith.constant 0 : index
    %c0_2 = arith.constant 0 : index
    %0 = vector.load %arg1[%c0, %c0_0, %c0_1, %c0_2] : memref<2x4x8x16xf32, #tpu.memory_space<vmem>>, vector<2x4x8x16xf32>
    %c0_3 = arith.constant 0 : index
    %c0_4 = arith.constant 0 : index
    %c0_5 = arith.constant 0 : index
    %c0_6 = arith.constant 0 : index
    %1 = vector.load %arg2[%c0_3, %c0_4, %c0_5, %c0_6] : memref<2x1x8x16xi32, #tpu.memory_space<vmem>>, vector<2x1x8x16xi32>
    %2 = vector.shape_cast %1 : vector<2x1x8x16xi32> to vector<2x8x16xi32>
    %c0_i32 = arith.constant 0 : i32
    %3 = arith.cmpi eq, %arg0, %c0_i32 : i32
    %4 = arith.extui %3 : i1 to i32
    %c0_i32_7 = arith.constant 0 : i32
    %5 = arith.cmpi ne, %4, %c0_i32_7 : i32
    scf.if %5 {
      %cst_65 = arith.constant 0.000000e+00 : f32
      %c0_66 = arith.constant 0 : index
      %234 = memref.load %arg4[%c0_66] : memref<1xf32, #tpu.memory_space<smem>>
      memref.store %cst_65, %arg4[%c0_66] : memref<1xf32, #tpu.memory_space<smem>>
      %cst_67 = arith.constant 0.000000e+00 : f32
      %c0_68 = arith.constant 0 : index
      %235 = memref.load %arg5[%c0_68] : memref<4xf32, #tpu.memory_space<smem>>
      memref.store %cst_67, %arg5[%c0_68] : memref<4xf32, #tpu.memory_space<smem>>
      %cst_69 = arith.constant 0.000000e+00 : f32
      %c0_70 = arith.constant 0 : index
      %236 = memref.load %arg6[%c0_70] : memref<4xf32, #tpu.memory_space<smem>>
      memref.store %cst_69, %arg6[%c0_70] : memref<4xf32, #tpu.memory_space<smem>>
      %cst_71 = arith.constant 0.000000e+00 : f32
      %c0_72 = arith.constant 0 : index
      %237 = memref.load %arg7[%c0_72] : memref<4xf32, #tpu.memory_space<smem>>
      memref.store %cst_71, %arg7[%c0_72] : memref<4xf32, #tpu.memory_space<smem>>
      %cst_73 = arith.constant 0.000000e+00 : f32
      %c1_74 = arith.constant 1 : index
      %238 = memref.load %arg5[%c1_74] : memref<4xf32, #tpu.memory_space<smem>>
      memref.store %cst_73, %arg5[%c1_74] : memref<4xf32, #tpu.memory_space<smem>>
      %cst_75 = arith.constant 0.000000e+00 : f32
      %c1_76 = arith.constant 1 : index
      %239 = memref.load %arg6[%c1_76] : memref<4xf32, #tpu.memory_space<smem>>
      memref.store %cst_75, %arg6[%c1_76] : memref<4xf32, #tpu.memory_space<smem>>
      %cst_77 = arith.constant 0.000000e+00 : f32
      %c1_78 = arith.constant 1 : index
      %240 = memref.load %arg7[%c1_78] : memref<4xf32, #tpu.memory_space<smem>>
      memref.store %cst_77, %arg7[%c1_78] : memref<4xf32, #tpu.memory_space<smem>>
      %cst_79 = arith.constant 0.000000e+00 : f32
      %c2_80 = arith.constant 2 : index
      %241 = memref.load %arg5[%c2_80] : memref<4xf32, #tpu.memory_space<smem>>
      memref.store %cst_79, %arg5[%c2_80] : memref<4xf32, #tpu.memory_space<smem>>
      %cst_81 = arith.constant 0.000000e+00 : f32
      %c2_82 = arith.constant 2 : index
      %242 = memref.load %arg6[%c2_82] : memref<4xf32, #tpu.memory_space<smem>>
      memref.store %cst_81, %arg6[%c2_82] : memref<4xf32, #tpu.memory_space<smem>>
      %cst_83 = arith.constant 0.000000e+00 : f32
      %c2_84 = arith.constant 2 : index
      %243 = memref.load %arg7[%c2_84] : memref<4xf32, #tpu.memory_space<smem>>
      memref.store %cst_83, %arg7[%c2_84] : memref<4xf32, #tpu.memory_space<smem>>
      %cst_85 = arith.constant 0.000000e+00 : f32
      %c3_86 = arith.constant 3 : index
      %244 = memref.load %arg5[%c3_86] : memref<4xf32, #tpu.memory_space<smem>>
      memref.store %cst_85, %arg5[%c3_86] : memref<4xf32, #tpu.memory_space<smem>>
      %cst_87 = arith.constant 0.000000e+00 : f32
      %c3_88 = arith.constant 3 : index
      %245 = memref.load %arg6[%c3_88] : memref<4xf32, #tpu.memory_space<smem>>
      memref.store %cst_87, %arg6[%c3_88] : memref<4xf32, #tpu.memory_space<smem>>
      %cst_89 = arith.constant 0.000000e+00 : f32
      %c3_90 = arith.constant 3 : index
      %246 = memref.load %arg7[%c3_90] : memref<4xf32, #tpu.memory_space<smem>>
      memref.store %cst_89, %arg7[%c3_90] : memref<4xf32, #tpu.memory_space<smem>>
    } else {
    }
    %6 = vector.extract_strided_slice %0 {offsets = [0, 0, 0, 0], sizes = [2, 1, 8, 16], strides = [1, 1, 1, 1]} : vector<2x4x8x16xf32> to vector<2x1x8x16xf32>
    %7 = vector.shape_cast %6 : vector<2x1x8x16xf32> to vector<2x8x16xf32>
    %c0_i32_8 = arith.constant 0 : i32
    %8 = vector.broadcast %c0_i32_8 : i32 to vector<2x8x16xi32>
    %9 = vector.extract_strided_slice %0 {offsets = [0, 1, 0, 0], sizes = [2, 1, 8, 16], strides = [1, 1, 1, 1]} : vector<2x4x8x16xf32> to vector<2x1x8x16xf32>
    %10 = vector.shape_cast %9 : vector<2x1x8x16xf32> to vector<2x8x16xf32>
    %11 = arith.cmpf ogt, %10, %7 : vector<2x8x16xf32>
    %12 = vector.extract_strided_slice %0 {offsets = [0, 1, 0, 0], sizes = [2, 1, 8, 16], strides = [1, 1, 1, 1]} : vector<2x4x8x16xf32> to vector<2x1x8x16xf32>
    %13 = vector.shape_cast %12 : vector<2x1x8x16xf32> to vector<2x8x16xf32>
    %14 = arith.select %11, %13, %7 : vector<2x8x16xi1>, vector<2x8x16xf32>
    %c1_i32 = arith.constant 1 : i32
    %15 = vector.broadcast %c1_i32 : i32 to vector<2x8x16xi32>
    %16 = arith.select %11, %15, %8 : vector<2x8x16xi1>, vector<2x8x16xi32>
    %17 = vector.extract_strided_slice %0 {offsets = [0, 2, 0, 0], sizes = [2, 1, 8, 16], strides = [1, 1, 1, 1]} : vector<2x4x8x16xf32> to vector<2x1x8x16xf32>
    %18 = vector.shape_cast %17 : vector<2x1x8x16xf32> to vector<2x8x16xf32>
    %19 = arith.cmpf ogt, %18, %14 : vector<2x8x16xf32>
    %20 = vector.extract_strided_slice %0 {offsets = [0, 2, 0, 0], sizes = [2, 1, 8, 16], strides = [1, 1, 1, 1]} : vector<2x4x8x16xf32> to vector<2x1x8x16xf32>
    %21 = vector.shape_cast %20 : vector<2x1x8x16xf32> to vector<2x8x16xf32>
    %22 = arith.select %19, %21, %14 : vector<2x8x16xi1>, vector<2x8x16xf32>
    %c2_i32 = arith.constant 2 : i32
    %23 = vector.broadcast %c2_i32 : i32 to vector<2x8x16xi32>
    %24 = arith.select %19, %23, %16 : vector<2x8x16xi1>, vector<2x8x16xi32>
    %25 = vector.extract_strided_slice %0 {offsets = [0, 3, 0, 0], sizes = [2, 1, 8, 16], strides = [1, 1, 1, 1]} : vector<2x4x8x16xf32> to vector<2x1x8x16xf32>
    %26 = vector.shape_cast %25 : vector<2x1x8x16xf32> to vector<2x8x16xf32>
    %27 = arith.cmpf ogt, %26, %22 : vector<2x8x16xf32>
    %28 = vector.extract_strided_slice %0 {offsets = [0, 3, 0, 0], sizes = [2, 1, 8, 16], strides = [1, 1, 1, 1]} : vector<2x4x8x16xf32> to vector<2x1x8x16xf32>
    %29 = vector.shape_cast %28 : vector<2x1x8x16xf32> to vector<2x8x16xf32>
    %30 = arith.select %27, %29, %22 : vector<2x8x16xi1>, vector<2x8x16xf32>
    %c3_i32 = arith.constant 3 : i32
    %31 = vector.broadcast %c3_i32 : i32 to vector<2x8x16xi32>
    %32 = arith.select %27, %31, %24 : vector<2x8x16xi1>, vector<2x8x16xi32>
    %33 = vector.extract_strided_slice %0 {offsets = [0, 0, 0, 0], sizes = [2, 1, 8, 16], strides = [1, 1, 1, 1]} : vector<2x4x8x16xf32> to vector<2x1x8x16xf32>
    %34 = vector.shape_cast %33 : vector<2x1x8x16xf32> to vector<2x8x16xf32>
    %35 = arith.subf %34, %30 : vector<2x8x16xf32>
    %36 = math.exp %35 : vector<2x8x16xf32>
    %37 = vector.extract_strided_slice %0 {offsets = [0, 1, 0, 0], sizes = [2, 1, 8, 16], strides = [1, 1, 1, 1]} : vector<2x4x8x16xf32> to vector<2x1x8x16xf32>
    %38 = vector.shape_cast %37 : vector<2x1x8x16xf32> to vector<2x8x16xf32>
    %39 = arith.subf %38, %30 : vector<2x8x16xf32>
    %40 = math.exp %39 : vector<2x8x16xf32>
    %41 = arith.addf %36, %40 : vector<2x8x16xf32>
    %42 = vector.extract_strided_slice %0 {offsets = [0, 2, 0, 0], sizes = [2, 1, 8, 16], strides = [1, 1, 1, 1]} : vector<2x4x8x16xf32> to vector<2x1x8x16xf32>
    %43 = vector.shape_cast %42 : vector<2x1x8x16xf32> to vector<2x8x16xf32>
    %44 = arith.subf %43, %30 : vector<2x8x16xf32>
    %45 = math.exp %44 : vector<2x8x16xf32>
    %46 = arith.addf %41, %45 : vector<2x8x16xf32>
    %47 = vector.extract_strided_slice %0 {offsets = [0, 3, 0, 0], sizes = [2, 1, 8, 16], strides = [1, 1, 1, 1]} : vector<2x4x8x16xf32> to vector<2x1x8x16xf32>
    %48 = vector.shape_cast %47 : vector<2x1x8x16xf32> to vector<2x8x16xf32>
    %49 = arith.subf %48, %30 : vector<2x8x16xf32>
    %50 = math.exp %49 : vector<2x8x16xf32>
    %51 = arith.addf %46, %50 : vector<2x8x16xf32>
    %cst = arith.constant 1.000000e+00 : f32
    %52 = vector.broadcast %cst : f32 to vector<2x8x16xf32>
    %53 = arith.divf %52, %51 : vector<2x8x16xf32>
    %54 = math.log %51 : vector<2x8x16xf32>
    %55 = arith.addf %30, %54 : vector<2x8x16xf32>
    %56 = vector.shape_cast %55 : vector<2x8x16xf32> to vector<1x2x8x16xf32>
    %cst_9 = arith.constant dense<0.000000e+00> : vector<1xf32>
    %57 = vector.multi_reduction <add>, %56, %cst_9 [1, 2, 3] : vector<1x2x8x16xf32> to vector<1xf32>
    %58 = vector.shape_cast %57 : vector<1xf32> to vector<1x1x1x1xf32>
    %59 = vector.extract %58[0, 0, 0, 0] : f32 from vector<1x1x1x1xf32>
    %60 = vector.extract_strided_slice %0 {offsets = [0, 0, 0, 0], sizes = [2, 1, 8, 16], strides = [1, 1, 1, 1]} : vector<2x4x8x16xf32> to vector<2x1x8x16xf32>
    %61 = vector.shape_cast %60 : vector<2x1x8x16xf32> to vector<2x8x16xf32>
    %c0_i32_10 = arith.constant 0 : i32
    %62 = vector.broadcast %c0_i32_10 : i32 to vector<2x8x16xi32>
    %63 = arith.cmpi eq, %2, %62 : vector<2x8x16xi32>
    %64 = arith.extui %63 : vector<2x8x16xi1> to vector<2x8x16xi32>
    %65 = arith.sitofp %64 : vector<2x8x16xi32> to vector<2x8x16xf32>
    %66 = arith.mulf %61, %65 : vector<2x8x16xf32>
    %67 = vector.shape_cast %66 : vector<2x8x16xf32> to vector<1x2x8x16xf32>
    %cst_11 = arith.constant dense<0.000000e+00> : vector<1xf32>
    %68 = vector.multi_reduction <add>, %67, %cst_11 [1, 2, 3] : vector<1x2x8x16xf32> to vector<1xf32>
    %69 = vector.shape_cast %68 : vector<1xf32> to vector<1x1x1x1xf32>
    %70 = vector.extract %69[0, 0, 0, 0] : f32 from vector<1x1x1x1xf32>
    %cst_12 = arith.constant 0.000000e+00 : f32
    %71 = arith.addf %cst_12, %70 : f32
    %72 = vector.extract_strided_slice %0 {offsets = [0, 1, 0, 0], sizes = [2, 1, 8, 16], strides = [1, 1, 1, 1]} : vector<2x4x8x16xf32> to vector<2x1x8x16xf32>
    %73 = vector.shape_cast %72 : vector<2x1x8x16xf32> to vector<2x8x16xf32>
    %c1_i32_13 = arith.constant 1 : i32
    %74 = vector.broadcast %c1_i32_13 : i32 to vector<2x8x16xi32>
    %75 = arith.cmpi eq, %2, %74 : vector<2x8x16xi32>
    %76 = arith.extui %75 : vector<2x8x16xi1> to vector<2x8x16xi32>
    %77 = arith.sitofp %76 : vector<2x8x16xi32> to vector<2x8x16xf32>
    %78 = arith.mulf %73, %77 : vector<2x8x16xf32>
    %79 = vector.shape_cast %78 : vector<2x8x16xf32> to vector<1x2x8x16xf32>
    %cst_14 = arith.constant dense<0.000000e+00> : vector<1xf32>
    %80 = vector.multi_reduction <add>, %79, %cst_14 [1, 2, 3] : vector<1x2x8x16xf32> to vector<1xf32>
    %81 = vector.shape_cast %80 : vector<1xf32> to vector<1x1x1x1xf32>
    %82 = vector.extract %81[0, 0, 0, 0] : f32 from vector<1x1x1x1xf32>
    %83 = arith.addf %71, %82 : f32
    %84 = arith.mulf %40, %53 : vector<2x8x16xf32>
    %c1 = arith.constant 1 : index
    %85 = memref.load %arg5[%c1] : memref<4xf32, #tpu.memory_space<smem>>
    %86 = arith.mulf %84, %77 : vector<2x8x16xf32>
    %87 = vector.shape_cast %86 : vector<2x8x16xf32> to vector<1x2x8x16xf32>
    %cst_15 = arith.constant dense<0.000000e+00> : vector<1xf32>
    %88 = vector.multi_reduction <add>, %87, %cst_15 [1, 2, 3] : vector<1x2x8x16xf32> to vector<1xf32>
    %89 = vector.shape_cast %88 : vector<1xf32> to vector<1x1x1x1xf32>
    %90 = vector.extract %89[0, 0, 0, 0] : f32 from vector<1x1x1x1xf32>
    %91 = arith.addf %85, %90 : f32
    %c1_16 = arith.constant 1 : index
    %92 = memref.load %arg5[%c1_16] : memref<4xf32, #tpu.memory_space<smem>>
    memref.store %91, %arg5[%c1_16] : memref<4xf32, #tpu.memory_space<smem>>
    %c1_17 = arith.constant 1 : index
    %93 = memref.load %arg6[%c1_17] : memref<4xf32, #tpu.memory_space<smem>>
    %94 = vector.shape_cast %84 : vector<2x8x16xf32> to vector<1x2x8x16xf32>
    %cst_18 = arith.constant dense<0.000000e+00> : vector<1xf32>
    %95 = vector.multi_reduction <add>, %94, %cst_18 [1, 2, 3] : vector<1x2x8x16xf32> to vector<1xf32>
    %96 = vector.shape_cast %95 : vector<1xf32> to vector<1x1x1x1xf32>
    %97 = vector.extract %96[0, 0, 0, 0] : f32 from vector<1x1x1x1xf32>
    %98 = arith.addf %93, %97 : f32
    %c1_19 = arith.constant 1 : index
    %99 = memref.load %arg6[%c1_19] : memref<4xf32, #tpu.memory_space<smem>>
    memref.store %98, %arg6[%c1_19] : memref<4xf32, #tpu.memory_space<smem>>
    %c1_20 = arith.constant 1 : index
    %100 = memref.load %arg7[%c1_20] : memref<4xf32, #tpu.memory_space<smem>>
    %101 = vector.shape_cast %77 : vector<2x8x16xf32> to vector<1x2x8x16xf32>
    %cst_21 = arith.constant dense<0.000000e+00> : vector<1xf32>
    %102 = vector.multi_reduction <add>, %101, %cst_21 [1, 2, 3] : vector<1x2x8x16xf32> to vector<1xf32>
    %103 = vector.shape_cast %102 : vector<1xf32> to vector<1x1x1x1xf32>
    %104 = vector.extract %103[0, 0, 0, 0] : f32 from vector<1x1x1x1xf32>
    %105 = arith.addf %100, %104 : f32
    %c1_22 = arith.constant 1 : index
    %106 = memref.load %arg7[%c1_22] : memref<4xf32, #tpu.memory_space<smem>>
    memref.store %105, %arg7[%c1_22] : memref<4xf32, #tpu.memory_space<smem>>
    %c1_i32_23 = arith.constant 1 : i32
    %107 = vector.broadcast %c1_i32_23 : i32 to vector<2x8x16xi32>
    %108 = arith.cmpi eq, %32, %107 : vector<2x8x16xi32>
    %cst_24 = arith.constant dense<true> : vector<2x8x16xi1>
    %109 = arith.xori %75, %cst_24 : vector<2x8x16xi1>
    %110 = arith.andi %108, %109 : vector<2x8x16xi1>
    %111 = arith.extui %110 : vector<2x8x16xi1> to vector<2x8x16xi32>
    %112 = arith.sitofp %111 : vector<2x8x16xi32> to vector<2x8x16xf32>
    %cst_25 = arith.constant dense<true> : vector<2x8x16xi1>
    %113 = arith.xori %108, %cst_25 : vector<2x8x16xi1>
    %114 = arith.andi %113, %75 : vector<2x8x16xi1>
    %115 = arith.extui %114 : vector<2x8x16xi1> to vector<2x8x16xi32>
    %116 = arith.sitofp %115 : vector<2x8x16xi32> to vector<2x8x16xf32>
    %117 = arith.mulf %73, %112 : vector<2x8x16xf32>
    %cst_26 = arith.constant dense<0.000000e+00> : vector<2x8xf32>
    %118 = vector.multi_reduction <add>, %117, %cst_26 [2] : vector<2x8x16xf32> to vector<2x8xf32>
    %cst_27 = arith.constant dense<0.000000e+00> : vector<2x8xf32>
    %119 = vector.multi_reduction <add>, %116, %cst_27 [2] : vector<2x8x16xf32> to vector<2x8xf32>
    %120 = vector.extract_strided_slice %0 {offsets = [0, 2, 0, 0], sizes = [2, 1, 8, 16], strides = [1, 1, 1, 1]} : vector<2x4x8x16xf32> to vector<2x1x8x16xf32>
    %121 = vector.shape_cast %120 : vector<2x1x8x16xf32> to vector<2x8x16xf32>
    %c2_i32_28 = arith.constant 2 : i32
    %122 = vector.broadcast %c2_i32_28 : i32 to vector<2x8x16xi32>
    %123 = arith.cmpi eq, %2, %122 : vector<2x8x16xi32>
    %124 = arith.extui %123 : vector<2x8x16xi1> to vector<2x8x16xi32>
    %125 = arith.sitofp %124 : vector<2x8x16xi32> to vector<2x8x16xf32>
    %126 = arith.mulf %121, %125 : vector<2x8x16xf32>
    %127 = vector.shape_cast %126 : vector<2x8x16xf32> to vector<1x2x8x16xf32>
    %cst_29 = arith.constant dense<0.000000e+00> : vector<1xf32>
    %128 = vector.multi_reduction <add>, %127, %cst_29 [1, 2, 3] : vector<1x2x8x16xf32> to vector<1xf32>
    %129 = vector.shape_cast %128 : vector<1xf32> to vector<1x1x1x1xf32>
    %130 = vector.extract %129[0, 0, 0, 0] : f32 from vector<1x1x1x1xf32>
    %131 = arith.addf %83, %130 : f32
    %132 = arith.mulf %45, %53 : vector<2x8x16xf32>
    %c2 = arith.constant 2 : index
    %133 = memref.load %arg5[%c2] : memref<4xf32, #tpu.memory_space<smem>>
    %134 = arith.mulf %132, %125 : vector<2x8x16xf32>
    %135 = vector.shape_cast %134 : vector<2x8x16xf32> to vector<1x2x8x16xf32>
    %cst_30 = arith.constant dense<0.000000e+00> : vector<1xf32>
    %136 = vector.multi_reduction <add>, %135, %cst_30 [1, 2, 3] : vector<1x2x8x16xf32> to vector<1xf32>
    %137 = vector.shape_cast %136 : vector<1xf32> to vector<1x1x1x1xf32>
    %138 = vector.extract %137[0, 0, 0, 0] : f32 from vector<1x1x1x1xf32>
    %139 = arith.addf %133, %138 : f32
    %c2_31 = arith.constant 2 : index
    %140 = memref.load %arg5[%c2_31] : memref<4xf32, #tpu.memory_space<smem>>
    memref.store %139, %arg5[%c2_31] : memref<4xf32, #tpu.memory_space<smem>>
    %c2_32 = arith.constant 2 : index
    %141 = memref.load %arg6[%c2_32] : memref<4xf32, #tpu.memory_space<smem>>
    %142 = vector.shape_cast %132 : vector<2x8x16xf32> to vector<1x2x8x16xf32>
    %cst_33 = arith.constant dense<0.000000e+00> : vector<1xf32>
    %143 = vector.multi_reduction <add>, %142, %cst_33 [1, 2, 3] : vector<1x2x8x16xf32> to vector<1xf32>
    %144 = vector.shape_cast %143 : vector<1xf32> to vector<1x1x1x1xf32>
    %145 = vector.extract %144[0, 0, 0, 0] : f32 from vector<1x1x1x1xf32>
    %146 = arith.addf %141, %145 : f32
    %c2_34 = arith.constant 2 : index
    %147 = memref.load %arg6[%c2_34] : memref<4xf32, #tpu.memory_space<smem>>
    memref.store %146, %arg6[%c2_34] : memref<4xf32, #tpu.memory_space<smem>>
    %c2_35 = arith.constant 2 : index
    %148 = memref.load %arg7[%c2_35] : memref<4xf32, #tpu.memory_space<smem>>
    %149 = vector.shape_cast %125 : vector<2x8x16xf32> to vector<1x2x8x16xf32>
    %cst_36 = arith.constant dense<0.000000e+00> : vector<1xf32>
    %150 = vector.multi_reduction <add>, %149, %cst_36 [1, 2, 3] : vector<1x2x8x16xf32> to vector<1xf32>
    %151 = vector.shape_cast %150 : vector<1xf32> to vector<1x1x1x1xf32>
    %152 = vector.extract %151[0, 0, 0, 0] : f32 from vector<1x1x1x1xf32>
    %153 = arith.addf %148, %152 : f32
    %c2_37 = arith.constant 2 : index
    %154 = memref.load %arg7[%c2_37] : memref<4xf32, #tpu.memory_space<smem>>
    memref.store %153, %arg7[%c2_37] : memref<4xf32, #tpu.memory_space<smem>>
    %c2_i32_38 = arith.constant 2 : i32
    %155 = vector.broadcast %c2_i32_38 : i32 to vector<2x8x16xi32>
    %156 = arith.cmpi eq, %32, %155 : vector<2x8x16xi32>
    %cst_39 = arith.constant dense<true> : vector<2x8x16xi1>
    %157 = arith.xori %123, %cst_39 : vector<2x8x16xi1>
    %158 = arith.andi %156, %157 : vector<2x8x16xi1>
    %159 = arith.extui %158 : vector<2x8x16xi1> to vector<2x8x16xi32>
    %160 = arith.sitofp %159 : vector<2x8x16xi32> to vector<2x8x16xf32>
    %cst_40 = arith.constant dense<true> : vector<2x8x16xi1>
    %161 = arith.xori %156, %cst_40 : vector<2x8x16xi1>
    %162 = arith.andi %161, %123 : vector<2x8x16xi1>
    %163 = arith.extui %162 : vector<2x8x16xi1> to vector<2x8x16xi32>
    %164 = arith.sitofp %163 : vector<2x8x16xi32> to vector<2x8x16xf32>
    %165 = arith.mulf %121, %160 : vector<2x8x16xf32>
    %cst_41 = arith.constant dense<0.000000e+00> : vector<2x8xf32>
    %166 = vector.multi_reduction <add>, %165, %cst_41 [2] : vector<2x8x16xf32> to vector<2x8xf32>
    %cst_42 = arith.constant dense<0.000000e+00> : vector<2x8xf32>
    %167 = vector.multi_reduction <add>, %164, %cst_42 [2] : vector<2x8x16xf32> to vector<2x8xf32>
    %168 = vector.extract_strided_slice %0 {offsets = [0, 3, 0, 0], sizes = [2, 1, 8, 16], strides = [1, 1, 1, 1]} : vector<2x4x8x16xf32> to vector<2x1x8x16xf32>
    %169 = vector.shape_cast %168 : vector<2x1x8x16xf32> to vector<2x8x16xf32>
    %c3_i32_43 = arith.constant 3 : i32
    %170 = vector.broadcast %c3_i32_43 : i32 to vector<2x8x16xi32>
    %171 = arith.cmpi eq, %2, %170 : vector<2x8x16xi32>
    %172 = arith.extui %171 : vector<2x8x16xi1> to vector<2x8x16xi32>
    %173 = arith.sitofp %172 : vector<2x8x16xi32> to vector<2x8x16xf32>
    %174 = arith.mulf %169, %173 : vector<2x8x16xf32>
    %175 = vector.shape_cast %174 : vector<2x8x16xf32> to vector<1x2x8x16xf32>
    %cst_44 = arith.constant dense<0.000000e+00> : vector<1xf32>
    %176 = vector.multi_reduction <add>, %175, %cst_44 [1, 2, 3] : vector<1x2x8x16xf32> to vector<1xf32>
    %177 = vector.shape_cast %176 : vector<1xf32> to vector<1x1x1x1xf32>
    %178 = vector.extract %177[0, 0, 0, 0] : f32 from vector<1x1x1x1xf32>
    %179 = arith.addf %131, %178 : f32
    %180 = arith.mulf %50, %53 : vector<2x8x16xf32>
    %c3 = arith.constant 3 : index
    %181 = memref.load %arg5[%c3] : memref<4xf32, #tpu.memory_space<smem>>
    %182 = arith.mulf %180, %173 : vector<2x8x16xf32>
    %183 = vector.shape_cast %182 : vector<2x8x16xf32> to vector<1x2x8x16xf32>
    %cst_45 = arith.constant dense<0.000000e+00> : vector<1xf32>
    %184 = vector.multi_reduction <add>, %183, %cst_45 [1, 2, 3] : vector<1x2x8x16xf32> to vector<1xf32>
    %185 = vector.shape_cast %184 : vector<1xf32> to vector<1x1x1x1xf32>
    %186 = vector.extract %185[0, 0, 0, 0] : f32 from vector<1x1x1x1xf32>
    %187 = arith.addf %181, %186 : f32
    %c3_46 = arith.constant 3 : index
    %188 = memref.load %arg5[%c3_46] : memref<4xf32, #tpu.memory_space<smem>>
    memref.store %187, %arg5[%c3_46] : memref<4xf32, #tpu.memory_space<smem>>
    %c3_47 = arith.constant 3 : index
    %189 = memref.load %arg6[%c3_47] : memref<4xf32, #tpu.memory_space<smem>>
    %190 = vector.shape_cast %180 : vector<2x8x16xf32> to vector<1x2x8x16xf32>
    %cst_48 = arith.constant dense<0.000000e+00> : vector<1xf32>
    %191 = vector.multi_reduction <add>, %190, %cst_48 [1, 2, 3] : vector<1x2x8x16xf32> to vector<1xf32>
    %192 = vector.shape_cast %191 : vector<1xf32> to vector<1x1x1x1xf32>
    %193 = vector.extract %192[0, 0, 0, 0] : f32 from vector<1x1x1x1xf32>
    %194 = arith.addf %189, %193 : f32
    %c3_49 = arith.constant 3 : index
    %195 = memref.load %arg6[%c3_49] : memref<4xf32, #tpu.memory_space<smem>>
    memref.store %194, %arg6[%c3_49] : memref<4xf32, #tpu.memory_space<smem>>
    %c3_50 = arith.constant 3 : index
    %196 = memref.load %arg7[%c3_50] : memref<4xf32, #tpu.memory_space<smem>>
    %197 = vector.shape_cast %173 : vector<2x8x16xf32> to vector<1x2x8x16xf32>
    %cst_51 = arith.constant dense<0.000000e+00> : vector<1xf32>
    %198 = vector.multi_reduction <add>, %197, %cst_51 [1, 2, 3] : vector<1x2x8x16xf32> to vector<1xf32>
    %199 = vector.shape_cast %198 : vector<1xf32> to vector<1x1x1x1xf32>
    %200 = vector.extract %199[0, 0, 0, 0] : f32 from vector<1x1x1x1xf32>
    %201 = arith.addf %196, %200 : f32
    %c3_52 = arith.constant 3 : index
    %202 = memref.load %arg7[%c3_52] : memref<4xf32, #tpu.memory_space<smem>>
    memref.store %201, %arg7[%c3_52] : memref<4xf32, #tpu.memory_space<smem>>
    %c3_i32_53 = arith.constant 3 : i32
    %203 = vector.broadcast %c3_i32_53 : i32 to vector<2x8x16xi32>
    %204 = arith.cmpi eq, %32, %203 : vector<2x8x16xi32>
    %cst_54 = arith.constant dense<true> : vector<2x8x16xi1>
    %205 = arith.xori %171, %cst_54 : vector<2x8x16xi1>
    %206 = arith.andi %204, %205 : vector<2x8x16xi1>
    %207 = arith.extui %206 : vector<2x8x16xi1> to vector<2x8x16xi32>
    %208 = arith.sitofp %207 : vector<2x8x16xi32> to vector<2x8x16xf32>
    %cst_55 = arith.constant dense<true> : vector<2x8x16xi1>
    %209 = arith.xori %204, %cst_55 : vector<2x8x16xi1>
    %210 = arith.andi %209, %171 : vector<2x8x16xi1>
    %211 = arith.extui %210 : vector<2x8x16xi1> to vector<2x8x16xi32>
    %212 = arith.sitofp %211 : vector<2x8x16xi32> to vector<2x8x16xf32>
    %213 = arith.mulf %169, %208 : vector<2x8x16xf32>
    %cst_56 = arith.constant dense<0.000000e+00> : vector<2x8xf32>
    %214 = vector.multi_reduction <add>, %213, %cst_56 [2] : vector<2x8x16xf32> to vector<2x8xf32>
    %cst_57 = arith.constant dense<0.000000e+00> : vector<2x8xf32>
    %215 = vector.multi_reduction <add>, %212, %cst_57 [2] : vector<2x8x16xf32> to vector<2x8xf32>
    %c0_58 = arith.constant 0 : index
    %216 = memref.load %arg4[%c0_58] : memref<1xf32, #tpu.memory_space<smem>>
    %217 = arith.subf %59, %179 : f32
    %218 = arith.addf %216, %217 : f32
    %c0_59 = arith.constant 0 : index
    %219 = memref.load %arg4[%c0_59] : memref<1xf32, #tpu.memory_space<smem>>
    memref.store %218, %arg4[%c0_59] : memref<1xf32, #tpu.memory_space<smem>>
    %cst_60 = arith.constant 0.000000e+00 : f32
    %220 = vector.broadcast %cst_60 : f32 to vector<2x8xf32>
    %221 = tpu.concatenate %118, %166, %214, %220 in 0 : vector<2x8xf32>, vector<2x8xf32>, vector<2x8xf32>, vector<2x8xf32> -> vector<8x8xf32>
    %222 = tpu.concatenate %119, %167, %215, %220 in 0 : vector<2x8xf32>, vector<2x8xf32>, vector<2x8xf32>, vector<2x8xf32> -> vector<8x8xf32>
    %c8_i32 = arith.constant 8 : i32
    %223 = arith.muli %arg0, %c8_i32 : i32
    %224 = tpu.assume_multiple %223, 8 : i32
    %225 = tpu.transpose %221, [1, 0] : vector<8x8xf32> -> vector<8x8xf32>
    %226 = arith.index_cast %224 : i32 to index
    %c0_61 = arith.constant 0 : index
    %227 = vector.load %arg8[%226, %c0_61] : memref<16x8xf32, #tpu.memory_space<vmem>>, vector<8x8xf32>
    tpu.vector_store %arg8[%226, %c0_61], %225 {strides = array<i32>} : memref<16x8xf32, #tpu.memory_space<vmem>>, vector<8x8xf32>,
    %228 = tpu.transpose %222, [1, 0] : vector<8x8xf32> -> vector<8x8xf32>
    %229 = arith.index_cast %224 : i32 to index
    %c0_62 = arith.constant 0 : index
    %230 = vector.load %arg9[%229, %c0_62] : memref<16x8xf32, #tpu.memory_space<vmem>>, vector<8x8xf32>
    tpu.vector_store %arg9[%229, %c0_62], %228 {strides = array<i32>} : memref<16x8xf32, #tpu.memory_space<vmem>>, vector<8x8xf32>,
    %c1_i32_63 = arith.constant 1 : i32
    %231 = arith.cmpi eq, %arg0, %c1_i32_63 : i32
    %232 = arith.extui %231 : i1 to i32
    %c0_i32_64 = arith.constant 0 : i32
    %233 = arith.cmpi ne, %232, %c0_i32_64 : i32
    scf.if %233 {
      %c0_65 = arith.constant 0 : index
      %234 = memref.load %arg4[%c0_65] : memref<1xf32, #tpu.memory_space<smem>>
      %cst_66 = arith.constant 5.120000e+02 : f32
      %235 = arith.divf %234, %cst_66 : f32
      %c1_67 = arith.constant 1 : index
      %236 = memref.load %arg5[%c1_67] : memref<4xf32, #tpu.memory_space<smem>>
      %cst_68 = arith.constant 2.000000e+00 : f32
      %237 = arith.mulf %cst_68, %236 : f32
      %cst_69 = arith.constant 9.99999974E-6 : f32
      %238 = arith.addf %237, %cst_69 : f32
      %c1_70 = arith.constant 1 : index
      %239 = memref.load %arg6[%c1_70] : memref<4xf32, #tpu.memory_space<smem>>
      %c1_71 = arith.constant 1 : index
      %240 = memref.load %arg7[%c1_71] : memref<4xf32, #tpu.memory_space<smem>>
      %241 = arith.addf %239, %240 : f32
      %cst_72 = arith.constant 9.99999974E-6 : f32
      %242 = arith.addf %241, %cst_72 : f32
      %cst_73 = arith.constant 9.99999993E-9 : f32
      %243 = arith.addf %242, %cst_73 : f32
      %244 = arith.divf %238, %243 : f32
      %cst_74 = arith.constant 0.000000e+00 : f32
      %245 = arith.addf %cst_74, %244 : f32
      %c2_75 = arith.constant 2 : index
      %246 = memref.load %arg5[%c2_75] : memref<4xf32, #tpu.memory_space<smem>>
      %cst_76 = arith.constant 2.000000e+00 : f32
      %247 = arith.mulf %cst_76, %246 : f32
      %cst_77 = arith.constant 9.99999974E-6 : f32
      %248 = arith.addf %247, %cst_77 : f32
      %c2_78 = arith.constant 2 : index
      %249 = memref.load %arg6[%c2_78] : memref<4xf32, #tpu.memory_space<smem>>
      %c2_79 = arith.constant 2 : index
      %250 = memref.load %arg7[%c2_79] : memref<4xf32, #tpu.memory_space<smem>>
      %251 = arith.addf %249, %250 : f32
      %cst_80 = arith.constant 9.99999974E-6 : f32
      %252 = arith.addf %251, %cst_80 : f32
      %cst_81 = arith.constant 9.99999993E-9 : f32
      %253 = arith.addf %252, %cst_81 : f32
      %254 = arith.divf %248, %253 : f32
      %255 = arith.addf %245, %254 : f32
      %c3_82 = arith.constant 3 : index
      %256 = memref.load %arg5[%c3_82] : memref<4xf32, #tpu.memory_space<smem>>
      %cst_83 = arith.constant 2.000000e+00 : f32
      %257 = arith.mulf %cst_83, %256 : f32
      %cst_84 = arith.constant 9.99999974E-6 : f32
      %258 = arith.addf %257, %cst_84 : f32
      %c3_85 = arith.constant 3 : index
      %259 = memref.load %arg6[%c3_85] : memref<4xf32, #tpu.memory_space<smem>>
      %c3_86 = arith.constant 3 : index
      %260 = memref.load %arg7[%c3_86] : memref<4xf32, #tpu.memory_space<smem>>
      %261 = arith.addf %259, %260 : f32
      %cst_87 = arith.constant 9.99999974E-6 : f32
      %262 = arith.addf %261, %cst_87 : f32
      %cst_88 = arith.constant 9.99999993E-9 : f32
      %263 = arith.addf %262, %cst_88 : f32
      %264 = arith.divf %258, %263 : f32
      %265 = arith.addf %255, %264 : f32
      %cst_89 = arith.constant 3.000000e+00 : f32
      %266 = arith.divf %265, %cst_89 : f32
      %cst_90 = arith.constant 0.000000e+00 : f32
      %267 = arith.subf %cst_90, %266 : f32
      %c0_91 = arith.constant 0 : index
      %c0_92 = arith.constant 0 : index
      %268 = vector.load %arg8[%c0_91, %c0_92] : memref<16x8xf32, #tpu.memory_space<vmem>>, vector<16x8xf32>
      %c0_93 = arith.constant 0 : index
      %c0_94 = arith.constant 0 : index
      %269 = vector.load %arg9[%c0_93, %c0_94] : memref<16x8xf32, #tpu.memory_space<vmem>>, vector<16x8xf32>
      %cst_95 = arith.constant dense<0.000000e+00> : vector<8xf32>
      %270 = vector.multi_reduction <add>, %268, %cst_95 [0] : vector<16x8xf32> to vector<8xf32>
      %271 = vector.shape_cast %270 : vector<8xf32> to vector<1x8xf32>
      %cst_96 = arith.constant dense<0.000000e+00> : vector<8xf32>
      %272 = vector.multi_reduction <add>, %269, %cst_96 [0] : vector<16x8xf32> to vector<8xf32>
      %273 = vector.shape_cast %272 : vector<8xf32> to vector<1x8xf32>
      %cst_97 = arith.constant 9.99999974E-6 : f32
      %274 = vector.broadcast %cst_97 : f32 to vector<1x8xf32>
      %275 = arith.addf %271, %274 : vector<1x8xf32>
      %276 = vector.broadcast %275 : vector<1x8xf32> to vector<16x8xf32>
      %277 = arith.divf %268, %276 : vector<16x8xf32>
      %cst_98 = arith.constant 9.99999974E-6 : f32
      %278 = vector.broadcast %cst_98 : f32 to vector<1x8xf32>
      %279 = arith.addf %273, %278 : vector<1x8xf32>
      %280 = vector.broadcast %279 : vector<1x8xf32> to vector<16x8xf32>
      %281 = arith.divf %269, %280 : vector<16x8xf32>
      %282 = arith.subf %277, %281 : vector<16x8xf32>
      %283 = tpu.iota {dimensions = array<i32: 0>} : vector<16x16xi32>
      %284 = tpu.iota {dimensions = array<i32: 1>} : vector<16x16xi32>
      %285 = arith.cmpi sge, %283, %284 : vector<16x16xi32>
      %286 = arith.extui %285 : vector<16x16xi1> to vector<16x16xi32>
      %287 = arith.sitofp %286 : vector<16x16xi32> to vector<16x16xf32>
      %cst_99 = arith.constant dense<0.000000e+00> : vector<16x8xf32>
      %288 = tpu.matmul %287, %282, %cst_99 {dimension_numbers = #tpu.dot_dimension_numbers<[1], [0], [0], [1], [0, 0, 1, 1], [], []>} : vector<16x16xf32>, vector<16x8xf32>, vector<16x8xf32> -> vector<16x8xf32>
      %289 = math.absf %288 : vector<16x8xf32>
      %290 = vector.shape_cast %289 : vector<16x8xf32> to vector<1x16x8xf32>
      %cst_100 = arith.constant dense<0.000000e+00> : vector<1xf32>
      %291 = vector.multi_reduction <add>, %290, %cst_100 [1, 2] : vector<1x16x8xf32> to vector<1xf32>
      %292 = vector.shape_cast %291 : vector<1xf32> to vector<1x1x1xf32>
      %293 = vector.extract %292[0, 0, 0] : f32 from vector<1x1x1xf32>
      %cst_101 = arith.constant 9.600000e+01 : f32
      %294 = arith.divf %293, %cst_101 : f32
      %cst_102 = arith.constant 4.000000e+00 : f32
      %295 = arith.mulf %294, %cst_102 : f32
      %296 = arith.addf %271, %273 : vector<1x8xf32>
      %297 = math.absf %296 : vector<1x8xf32>
      %298 = vector.shape_cast %297 : vector<1x8xf32> to vector<1x1x8xf32>
      %cst_103 = arith.constant dense<0.000000e+00> : vector<1xf32>
      %299 = vector.multi_reduction <add>, %298, %cst_103 [1, 2] : vector<1x1x8xf32> to vector<1xf32>
      %300 = vector.shape_cast %299 : vector<1xf32> to vector<1x1x1xf32>
      %301 = vector.extract %300[0, 0, 0] : f32 from vector<1x1x1xf32>
      %cst_104 = arith.constant 2.560000e+02 : f32
      %302 = arith.divf %301, %cst_104 : f32
      %cst_105 = arith.constant 6.000000e+00 : f32
      %303 = arith.divf %302, %cst_105 : f32
      %cst_106 = arith.constant 1.000000e-01 : f32
      %304 = arith.mulf %cst_106, %303 : f32
      %305 = arith.addf %295, %304 : f32
      %cst_107 = arith.constant 1.000000e+00 : f32
      %306 = arith.mulf %cst_107, %235 : f32
      %cst_108 = arith.constant 1.000000e+00 : f32
      %307 = arith.mulf %cst_108, %267 : f32
      %308 = arith.addf %306, %307 : f32
      %cst_109 = arith.constant 0.00999999977 : f32
      %309 = arith.mulf %cst_109, %305 : f32
      %310 = arith.addf %308, %309 : f32
      %c0_110 = arith.constant 0 : index
      %311 = memref.load %arg3[%c0_110] : memref<1xf32, #tpu.memory_space<smem>>
      memref.store %310, %arg3[%c0_110] : memref<1xf32, #tpu.memory_space<smem>>
    } else {
    }
    return
  }
  func.func @transform_0(%arg0: i32) -> (i32, i32, i32, i32) {
    %c0_i32 = arith.constant 0 : i32
    %c0_i32_0 = arith.constant 0 : i32
    %c0_i32_1 = arith.constant 0 : i32
    %c0_i32_2 = arith.constant 0 : i32
    return %c0_i32, %c0_i32_0, %arg0, %c0_i32_1 : i32, i32, i32, i32
  }
  func.func @transform_1(%arg0: i32) -> (i32, i32, i32, i32) {
    %c0_i32 = arith.constant 0 : i32
    %c0_i32_0 = arith.constant 0 : i32
    %c0_i32_1 = arith.constant 0 : i32
    %c0_i32_2 = arith.constant 0 : i32
    return %c0_i32, %c0_i32_0, %arg0, %c0_i32_1 : i32, i32, i32, i32
  }
  func.func @transform_2(%arg0: i32) -> i32 {
    %c0_i32 = arith.constant 0 : i32
    %c0_i32_0 = arith.constant 0 : i32
    return %c0_i32 : i32
  }
}

</mosaic_0001>

<llo_original>
// kernel: dc_and_lc_loss.1
$region0: #{dc_and_lc_loss.1}
  #allocation0 [shape = 'u32[]', space=smem, size = 0x4, offset = 0x4, fixed_abs, tag = 'smem constant byte address 0x4 - core index']
  #allocation1 [shape = 'u32[144,128]{1,0:T(1,128)}', space=vmem, size = 0x12000, scoped, tag = 'internal scratch']
  #allocation2 [shape = 'f32[1]{0:T(128)}', space=smem, size = 0x200, scoped, tag = 'scratch operand']
  #allocation3 [shape = 'f32[4]{0:T(128)}', space=smem, size = 0x200, scoped, tag = 'scratch operand']
  #allocation4 [shape = 'f32[4]{0:T(128)}', space=smem, size = 0x200, scoped, tag = 'scratch operand']
  #allocation5 [shape = 'f32[4]{0:T(128)}', space=smem, size = 0x200, scoped, tag = 'scratch operand']
  #allocation6 [shape = 'f32[16,8]{1,0:T(8,128)}', space=vmem, size = 0x2000, scoped, tag = 'scratch operand']
  #allocation7 [shape = 'f32[16,8]{1,0:T(8,128)}', space=vmem, size = 0x2000, scoped, tag = 'scratch operand']
  %s0 = inlined_call_operand.hbm [shape: f32[2,4,16,16], index: 0, kind: input, shape index: {}]
  %s1 = inlined_call_operand.hbm [shape: s32[2,1,16,16], index: 1, kind: input, shape index: {}]
  %s2 = inlined_call_operand.hbm [shape: f32[1], index: 2, kind: output, shape index: {}]
  %s3 = sld [smem:[#allocation0]]
  $region57: #{dc_and_lc_loss.1} parent=0
    _
  %s5 = ssub.s32 1, %s3
  %s6 = scalar_select 0, %s5, %s3
  $region1: #{dc_and_lc_loss.1} parent=0
    #allocation8 [shape = 'u8[65536]{0}', space=vmem, size = 0x10000, scoped, tag = 'input window, operand 0']
    #allocation9 [shape = 's32[2]{0}', space=sflag, size = 0x8, scoped, tag = 'scoped memory for dc_and_lc_loss.1']
    #allocation10 [shape = 's32[2]{0}', space=sflag, size = 0x8, scoped, tag = 'scoped memory for dc_and_lc_loss.1']
    #allocation11 [shape = 'u8[16384]{0}', space=vmem, size = 0x4000, scoped, tag = 'input window, operand 1']
    #allocation12 [shape = 's32[2]{0}', space=sflag, size = 0x8, scoped, tag = 'scoped memory for dc_and_lc_loss.1']
    #allocation13 [shape = 'u8[512]{0}', space=smem, size = 0x200, scoped, tag = 'output window, operand 0, single buffered']
    %7 = vsyncpa [#allocation9], 0
    %s8 = scalar_lea.sflag [#allocation9], 1
    %9 = vsyncpa %s8, 0
    %10 = vsyncpa [#allocation12], 0
    %s11 = scalar_lea.sflag [#allocation12], 1
    %12 = vsyncpa %s11, 0
    %13 = vsyncpa [#allocation10], 0
    loop: start=0, step=1, limit=4
    $region2: #{dc_and_lc_loss.1} parent=1 // loop_pre_header
      _
    $region3: #{dc_and_lc_loss.1} parent=1 // loop_header
      %s15 = sphi 0, %s19
      %p16 = scmp.ge.s32.totalorder %s15, 4
      %s25 = sphi 0, %s27
      %s28 = sphi 0, %s25
      %s29 = sphi 0, %s28
      %s45 = sphi 0, %s29
      %s51 = sphi 0, %s53
      %s54 = sphi 0, %s51
      %s55 = sphi 0, %s54
      %s71 = sphi 0, %s55
      %s75 = sphi 0, %s75
      %s77 = sphi 0, %s75
      %s78 = sphi 0, %s77
      %s92 = sphi 0, %s78
    $region4: #{dc_and_lc_loss.1} parent=1 // loop_header_branch
      %18 = sbr.rel (%p16) target = $region8
    $region5: #{dc_and_lc_loss.1} parent=1 // loop_body
      %s20 = ssub.s32 %s15, 1
      %s21 = ssub.s32 %s15, 2
      %s22 = sadd.s32 %s15, 1
      %s23 = ssub.s32 %s15, %s22
      %p24 = scmp.eq.s32.totalorder %s23, 0
      %s26 = sadd.s32 %s25, 1
      %s27 = scalar_select %p24, %s25, %s26
      %p30 = pneg %p24
      %p31 = scmp.eq.s32.totalorder %s15, 1
      %p32 = por %p30, %p31
      %p33 = scmp.ne.s32.totalorder %s25, %s28
      %p34 = scmp.eq.s32.totalorder %s15, 0
      %p35 = por %p33, %p34
      %p36 = scmp.ne.s32.totalorder %s25, %s28
      %p37 = scmp.eq.s32.totalorder %s20, 1
      %p38 = por %p36, %p37
      %p39 = scmp.ne.s32.totalorder %s28, %s29
      %p40 = scmp.eq.s32.totalorder %s20, 0
      %p41 = por %p39, %p40
      %p42 = scmp.ne.s32.totalorder %s28, %s29
      %p43 = scmp.eq.s32.totalorder %s21, 1
      %p44 = por %p42, %p43
      %p46 = scmp.ne.s32.totalorder %s29, %s45
      %p47 = scmp.eq.s32.totalorder %s21, 0
      %p48 = por %p46, %p47
      %s49 = ssub.s32 %s15, %s22
      %p50 = scmp.eq.s32.totalorder %s49, 0
      %s52 = sadd.s32 %s51, 1
      %s53 = scalar_select %p50, %s51, %s52
      %p56 = pneg %p50
      %p57 = scmp.eq.s32.totalorder %s15, 1
      %p58 = por %p56, %p57
      %p59 = scmp.ne.s32.totalorder %s51, %s54
      %p60 = scmp.eq.s32.totalorder %s15, 0
      %p61 = por %p59, %p60
      %p62 = scmp.ne.s32.totalorder %s51, %s54
      %p63 = scmp.eq.s32.totalorder %s20, 1
      %p64 = por %p62, %p63
      %p65 = scmp.ne.s32.totalorder %s54, %s55
      %p66 = scmp.eq.s32.totalorder %s20, 0
      %p67 = por %p65, %p66
      %p68 = scmp.ne.s32.totalorder %s54, %s55
      %p69 = scmp.eq.s32.totalorder %s21, 1
      %p70 = por %p68, %p69
      %p72 = scmp.ne.s32.totalorder %s55, %s71
      %p73 = scmp.eq.s32.totalorder %s21, 0
      %p74 = por %p72, %p73
      %s76 = sadd.s32 %s75, 1
      %p79 = scmp.eq.s32.totalorder %s15, 1
      %p80 = scmp.ne.s32.totalorder %s75, %s77
      %p81 = scmp.eq.s32.totalorder %s15, 0
      %p82 = por %p80, %p81
      %p83 = scmp.ne.s32.totalorder %s75, %s77
      %p84 = scmp.eq.s32.totalorder %s20, 1
      %p85 = por %p83, %p84
      %p86 = scmp.ne.s32.totalorder %s77, %s78
      %p87 = scmp.eq.s32.totalorder %s20, 0
      %p88 = por %p86, %p87
      %p89 = scmp.ne.s32.totalorder %s77, %s78
      %p90 = scmp.eq.s32.totalorder %s21, 1
      %p91 = por %p89, %p90
      %p93 = scmp.ne.s32.totalorder %s78, %s92
      %p94 = scmp.eq.s32.totalorder %s21, 0
      %p95 = por %p93, %p94
      %p96 = scmp.le.s32.totalorder 1, %s15
      %p97 = scmp.lt.s32.totalorder %s15, 3
      %p98 = pnand %p96, %p97
      %p99 = pneg %p98
      // Predicated region
      $region9: #{dc_and_lc_loss.1} parent=5 // pred_check
        _
      $region10: #{dc_and_lc_loss.1} parent=5 // pred_check_branch
        %101 = sbr.rel (%p98) target = $region12
      $region11: #{dc_and_lc_loss.1} parent=5 // pred_region
        %s102 = ssub.s32 %s15, 1
      $region12: #{dc_and_lc_loss.1} parent=5 // pred_fallthru
        _
      %p103 = scmp.lt.s32.totalorder %s15, 2
      // Predicated region
      $region13: #{dc_and_lc_loss.1} parent=5 // pred_check
        %p104 = pneg %p103
      $region14: #{dc_and_lc_loss.1} parent=5 // pred_check_branch
        %106 = sbr.rel (%p104) target = $region16
      $region15: #{dc_and_lc_loss.1} parent=5 // pred_region
        // Predicated region
        $region17: #{dc_and_lc_loss.1} parent=15 // pred_check
          %p107 = pneg %p35
        $region18: #{dc_and_lc_loss.1} parent=15 // pred_check_branch
          %109 = sbr.rel (%p107) target = $region20
        $region19: #{dc_and_lc_loss.1} parent=15 // pred_region
          %s110 = sand.u32 %s25, 1
          %s111 = scalar_lea.sflag [#allocation9], %s110
          %s112 = sand.u32 %s25, 1
          %s113 = smul.addr %s112, 64
          %s114 = scalar_lea.vmem [#allocation8], %s113
          %s116 = ssub.s32 1024, 1024
          %117 = vsyncadd %s111, %s116
          %s118 = smul.addr %s15, 128
          %s119 = scalar_lea.hbm %s0, %s118
          %s120 = sshll.u32 %s114, 4
          %s121 = int_to_ptr.vmem [resolvable:$true] %s120
          %126 = dma.hbm_to_vmem [thread:$0]  %s119, 1024, %s121, %s111, 256, 128, 8
        $region20: #{dc_and_lc_loss.1} parent=15 // pred_fallthru
          _
        // Predicated region
        $region21: #{dc_and_lc_loss.1} parent=15 // pred_check
          %p127 = pneg %p61
        $region22: #{dc_and_lc_loss.1} parent=15 // pred_check_branch
          %129 = sbr.rel (%p127) target = $region24
        $region23: #{dc_and_lc_loss.1} parent=15 // pred_region
          %s130 = sand.u32 %s51, 1
          %s131 = scalar_lea.sflag [#allocation12], %s130
          %s132 = sand.u32 %s51, 1
          %s133 = smul.addr %s132, 16
          %s134 = scalar_lea.vmem [#allocation11], %s133
          %s136 = ssub.s32 256, 256
          %137 = vsyncadd %s131, %s136
          %s138 = smul.addr %s15, 128
          %s139 = scalar_lea.hbm %s1, %s138
          %s140 = sshll.u32 %s134, 4
          %s141 = int_to_ptr.vmem [resolvable:$true] %s140
          %146 = dma.hbm_to_vmem [thread:$0]  %s139, 256, %s141, %s131, 256, 128, 8
        $region24: #{dc_and_lc_loss.1} parent=15 // pred_fallthru
          _
      $region16: #{dc_and_lc_loss.1} parent=5 // pred_fallthru
        _
      %p147 = scmp.le.s32.totalorder 1, %s15
      %p148 = scmp.lt.s32.totalorder %s15, 3
      %p149 = pnand %p147, %p148
      %p150 = pneg %p149
      // Predicated region
      $region25: #{dc_and_lc_loss.1} parent=5 // pred_check
        _
      $region26: #{dc_and_lc_loss.1} parent=5 // pred_check_branch
        %152 = sbr.rel (%p149) target = $region28
      $region27: #{dc_and_lc_loss.1} parent=5 // pred_region
        %s153 = ssub.s32 %s15, 1
        %s154 = sand.u32 %s28, 1
        %s155 = scalar_lea.sflag [#allocation9], %s154
        %s156 = sand.u32 %s28, 1
        %s157 = smul.addr %s156, 64
        %s158 = scalar_lea.vmem [#allocation8], %s157
        // Predicated region
        $region29: #{dc_and_lc_loss.1} parent=27 // pred_check
          %p159 = pneg %p41
        $region30: #{dc_and_lc_loss.1} parent=27 // pred_check_branch
          %161 = sbr.rel (%p159) target = $region32
        $region31: #{dc_and_lc_loss.1} parent=27 // pred_region
          %162 = dma.done %s155, 1024
        $region32: #{dc_and_lc_loss.1} parent=27 // pred_fallthru
          _
        %s163 = sand.u32 %s54, 1
        %s164 = scalar_lea.sflag [#allocation12], %s163
        %s165 = sand.u32 %s54, 1
        %s166 = smul.addr %s165, 16
        %s167 = scalar_lea.vmem [#allocation11], %s166
        // Predicated region
        $region33: #{dc_and_lc_loss.1} parent=27 // pred_check
          %p168 = pneg %p67
        $region34: #{dc_and_lc_loss.1} parent=27 // pred_check_branch
          %170 = sbr.rel (%p168) target = $region36
        $region35: #{dc_and_lc_loss.1} parent=27 // pred_region
          %171 = dma.done %s164, 256
        $region36: #{dc_and_lc_loss.1} parent=27 // pred_fallthru
          _
        %s172 = sand.u32 %s28, 1
        %s173 = scalar_lea.sflag [#allocation9], %s172
        %s174 = sand.u32 %s28, 1
        %s175 = smul.addr %s174, 64
        %s176 = scalar_lea.vmem [#allocation8], %s175
        %p177 = pneg %p41
        %p178 = pneg %p38
        %s179 = sand.u32 %s54, 1
        %s180 = scalar_lea.sflag [#allocation12], %s179
        %s181 = sand.u32 %s54, 1
        %s182 = smul.addr %s181, 16
        %s183 = scalar_lea.vmem [#allocation11], %s182
        %p184 = pneg %p67
        %p185 = pneg %p64
        %p186 = pneg %p88
        %p187 = pneg %p85
        %v188 = vld [vmem:[%s158] sm:$0xff]
        %v189 = vld [vmem:[%s158 + $0x8] sm:$0xff]
        %v190 = vld [vmem:[%s158 + $0x10] sm:$0xff]
        %v191 = vld [vmem:[%s158 + $0x18] sm:$0xff]
        %v192 = vld [vmem:[%s158 + $0x20] sm:$0xff]
        %v193 = vld [vmem:[%s158 + $0x28] sm:$0xff]
        %v194 = vld [vmem:[%s158 + $0x30] sm:$0xff]
        %v195 = vld [vmem:[%s158 + $0x38] sm:$0xff]
        %v196 = vld [vmem:[%s167] sm:$0xff]
        %v197 = vld [vmem:[%s167 + $0x8] sm:$0xff]
        %p198 = scmp.eq.s32.totalorder %s20, 0
        // Predicated region
        $region37: #{dc_and_lc_loss.1} parent=27 // pred_check
          %p199 = pneg %p198
        $region38: #{dc_and_lc_loss.1} parent=27 // pred_check_branch
          %201 = sbr.rel (%p199) target = $region40
        $region39: #{dc_and_lc_loss.1} parent=27 // pred_region
          %s202 = scalar_lea.smem [#allocation2], 0
          %203 = sst [smem:[%s202]] 0.0
          %s204 = scalar_lea.smem [#allocation3], 0
          %205 = sst [smem:[%s204]] 0.0
          %s206 = scalar_lea.smem [#allocation4], 0
          %207 = sst [smem:[%s206]] 0.0
          %s208 = scalar_lea.smem [#allocation5], 0
          %209 = sst [smem:[%s208]] 0.0
          %s210 = scalar_lea.smem [#allocation3], 1
          %211 = sst [smem:[%s210]] 0.0
          %s212 = scalar_lea.smem [#allocation4], 1
          %213 = sst [smem:[%s212]] 0.0
          %s214 = scalar_lea.smem [#allocation5], 1
          %215 = sst [smem:[%s214]] 0.0
          %s216 = scalar_lea.smem [#allocation3], 2
          %217 = sst [smem:[%s216]] 0.0
          %s218 = scalar_lea.smem [#allocation4], 2
          %219 = sst [smem:[%s218]] 0.0
          %s220 = scalar_lea.smem [#allocation5], 2
          %221 = sst [smem:[%s220]] 0.0
          %s222 = scalar_lea.smem [#allocation3], 3
          %223 = sst [smem:[%s222]] 0.0
          %s224 = scalar_lea.smem [#allocation4], 3
          %225 = sst [smem:[%s224]] 0.0
          %s226 = scalar_lea.smem [#allocation5], 3
          %227 = sst [smem:[%s226]] 0.0
        $region40: #{dc_and_lc_loss.1} parent=27 // pred_fallthru
          _
        %vm228 = vcmp.gt.f32.partialorder %v189, %v188
        %vm229 = vcmp.gt.f32.partialorder %v193, %v192
        %v230 = vsel %vm228, %v189, %v188
        %v231 = vsel %vm229, %v193, %v192
        %v232 = vsel %vm228, 1, 0
        %v233 = vsel %vm229, 1, 0
        %vm234 = vcmp.gt.f32.partialorder %v190, %v230
        %vm235 = vcmp.gt.f32.partialorder %v194, %v231
        %v236 = vsel %vm234, %v190, %v230
        %v237 = vsel %vm235, %v194, %v231
        %v238 = vsel %vm234, 2, %v232
        %v239 = vsel %vm235, 2, %v233
        %vm240 = vcmp.gt.f32.partialorder %v191, %v236
        %vm241 = vcmp.gt.f32.partialorder %v195, %v237
        %v242 = vsel %vm240, %v191, %v236
        %v243 = vsel %vm241, %v195, %v237
        %v244 = vsel %vm240, 3, %v238
        %v245 = vsel %vm241, 3, %v239
        %v246 = vsub.f32 %v188, %v242
        %v247 = vsub.f32 %v192, %v243
        %v248 = vmul.f32 %v246, 1.442695
        %v249 = vpow.pop %v248
        %v250 = vmul.f32 %v247, 1.442695
        %v251 = vpow.pop %v250
        %v252 = vsub.f32 %v189, %v242
        %v253 = vsub.f32 %v193, %v243
        %v254 = vmul.f32 %v252, 1.442695
        %v255 = vpow.pop %v254
        %v256 = vmul.f32 %v253, 1.442695
        %v257 = vpow.pop %v256
        %v258 = vadd.f32 %v249, %v255
        %v259 = vadd.f32 %v251, %v257
        %v260 = vsub.f32 %v190, %v242
        %v261 = vsub.f32 %v194, %v243
        %v262 = vmul.f32 %v260, 1.442695
        %v263 = vpow.pop %v262
        %v264 = vmul.f32 %v261, 1.442695
        %v265 = vpow.pop %v264
        %v266 = vadd.f32 %v258, %v263
        %v267 = vadd.f32 %v259, %v265
        %v268 = vsub.f32 %v191, %v242
        %v269 = vsub.f32 %v195, %v243
        %v270 = vmul.f32 %v268, 1.442695
        %v271 = vpow.pop %v270
        %v272 = vmul.f32 %v269, 1.442695
        %v273 = vpow.pop %v272
        %v274 = vadd.f32 %v266, %v271
        %v275 = vadd.f32 %v267, %v273
        %v276 = vrcp.pop %v274
        %v277 = vmul.f32 1.0, %v276
        %v278 = vrcp.pop %v275
        %v279 = vmul.f32 1.0, %v278
        %v280 = vlog2.pop %v274
        %v281 = vmul.f32 %v280, 0.6931472
        %v282 = vlog2.pop %v275
        %v283 = vmul.f32 %v282, 0.6931472
        %v284 = vadd.f32 %v242, %v281
        %v285 = vadd.f32 %v243, %v283
        %vm286 = vcmask 130048
        %v287 = vsel %vm286, %v284, 0.0
        %v288 = vsel %vm286, %v285, 0.0
        %v289 = vadd.f32 %v287, %v288
        %290 = vadd.xlane.f32.xlu0 %v289
        %v291 = vpop.xlane.xlu0 %290
        %v292 = vrot.slane %v291, 4
        %v293 = vadd.f32 %v291, %v292
        %v294 = vrot.slane %v293, 2
        %v295 = vadd.f32 %v293, %v294
        %v296 = vrot.slane %v295, 1
        %v297 = vadd.f32 %v295, %v296
        %s298 = vtos %v297
        %vm299 = vcmp.eq.s32.totalorder %v196, 0
        %vm300 = vcmp.eq.s32.totalorder %v197, 0
        %v301 = vsel %vm299, 1, 0
        %v302 = vsel %vm300, 1, 0
        %v303 = vcvt.s32.f32 %v301
        %v304 = vcvt.s32.f32 %v302
        %v305 = vmul.f32 %v188, %v303
        %v306 = vmul.f32 %v192, %v304
        %v307 = vsel %vm286, %v305, 0.0
        %v308 = vsel %vm286, %v306, 0.0
        %v309 = vadd.f32 %v307, %v308
        %310 = vadd.xlane.f32.xlu0 %v309
        %v311 = vpop.xlane.xlu0 %310
        %v312 = vrot.slane %v311, 4
        %v313 = vadd.f32 %v311, %v312
        %v314 = vrot.slane %v313, 2
        %v315 = vadd.f32 %v313, %v314
        %v316 = vrot.slane %v315, 1
        %v317 = vadd.f32 %v315, %v316
        %s318 = vtos %v317
        %s319 = sadd.f32 %s318, 0.0
        %vm320 = vcmp.eq.s32.totalorder %v196, 1
        %vm321 = vcmp.eq.s32.totalorder %v197, 1
        %v322 = vsel %vm320, 1, 0
        %v323 = vsel %vm321, 1, 0
        %v324 = vcvt.s32.f32 %v322
        %v325 = vcvt.s32.f32 %v323
        %v326 = vmul.f32 %v189, %v324
        %v327 = vmul.f32 %v193, %v325
        %v328 = vsel %vm286, %v326, 0.0
        %v329 = vsel %vm286, %v327, 0.0
        %v330 = vadd.f32 %v328, %v329
        %331 = vadd.xlane.f32.xlu0 %v330
        %v332 = vpop.xlane.xlu0 %331
        %v333 = vrot.slane %v332, 4
        %v334 = vadd.f32 %v332, %v333
        %v335 = vrot.slane %v334, 2
        %v336 = vadd.f32 %v334, %v335
        %v337 = vrot.slane %v336, 1
        %v338 = vadd.f32 %v336, %v337
        %s339 = vtos %v338
        %s340 = sadd.f32 %s319, %s339
        %v341 = vmul.f32 %v255, %v277
        %v342 = vmul.f32 %v257, %v279
        %s343 = sld [smem:[#allocation3 + $0x1]]
        %v344 = vmul.f32 %v341, %v324
        %v345 = vmul.f32 %v342, %v325
        %v346 = vsel %vm286, %v344, 0.0
        %v347 = vsel %vm286, %v345, 0.0
        %v348 = vadd.f32 %v346, %v347
        %349 = vadd.xlane.f32.xlu0 %v348
        %v350 = vpop.xlane.xlu0 %349
        %v351 = vrot.slane %v350, 4
        %v352 = vadd.f32 %v350, %v351
        %v353 = vrot.slane %v352, 2
        %v354 = vadd.f32 %v352, %v353
        %v355 = vrot.slane %v354, 1
        %v356 = vadd.f32 %v354, %v355
        %s357 = vtos %v356
        %s358 = sadd.f32 %s343, %s357
        %s359 = scalar_lea.smem [#allocation3], 1
        %360 = sst [smem:[%s359]] %s358
        %s361 = sld [smem:[#allocation4 + $0x1]]
        %v362 = vsel %vm286, %v341, 0.0
        %v363 = vsel %vm286, %v342, 0.0
        %v364 = vadd.f32 %v362, %v363
        %365 = vadd.xlane.f32.xlu0 %v364
        %v366 = vpop.xlane.xlu0 %365
        %v367 = vrot.slane %v366, 4
        %v368 = vadd.f32 %v366, %v367
        %v369 = vrot.slane %v368, 2
        %v370 = vadd.f32 %v368, %v369
        %v371 = vrot.slane %v370, 1
        %v372 = vadd.f32 %v370, %v371
        %s373 = vtos %v372
        %s374 = sadd.f32 %s361, %s373
        %s375 = scalar_lea.smem [#allocation4], 1
        %376 = sst [smem:[%s375]] %s374
        %s377 = sld [smem:[#allocation5 + $0x1]]
        %v378 = vsel %vm286, %v324, 0.0
        %v379 = vsel %vm286, %v325, 0.0
        %v380 = vadd.f32 %v378, %v379
        %381 = vadd.xlane.f32.xlu0 %v380
        %v382 = vpop.xlane.xlu0 %381
        %v383 = vrot.slane %v382, 4
        %v384 = vadd.f32 %v382, %v383
        %v385 = vrot.slane %v384, 2
        %v386 = vadd.f32 %v384, %v385
        %v387 = vrot.slane %v386, 1
        %v388 = vadd.f32 %v386, %v387
        %s389 = vtos %v388
        %s390 = sadd.f32 %s377, %s389
        %s391 = scalar_lea.smem [#allocation5], 1
        %392 = sst [smem:[%s391]] %s390
        %vm393 = vcmp.eq.s32.totalorder %v244, 1
        %vm394 = vcmp.eq.s32.totalorder %v245, 1
        %vm395 = vmxor %vm320, 1
        %vm396 = vmxor %vm321, 1
        %vm397 = vmand %vm393, %vm395
        %vm398 = vmand %vm394, %vm396
        %v399 = vsel %vm397, 1, 0
        %v400 = vsel %vm398, 1, 0
        %v401 = vcvt.s32.f32 %v399
        %v402 = vcvt.s32.f32 %v400
        %vm403 = vmxor %vm393, 1
        %vm404 = vmxor %vm394, 1
        %vm405 = vmand %vm403, %vm320
        %vm406 = vmand %vm404, %vm321
        %v407 = vsel %vm405, 1, 0
        %v408 = vsel %vm406, 1, 0
        %v409 = vcvt.s32.f32 %v407
        %v410 = vcvt.s32.f32 %v408
        %v411 = vmul.f32 %v189, %v401
        %v412 = vmul.f32 %v193, %v402
        %v413 = vsel %vm286, %v411, 0.0
        %414 = vadd.xlane.f32.xlu0 %v413
        %v415 = vpop.xlane.xlu0 %414
        %v416 = vsel %vm286, %v412, 0.0
        %417 = vadd.xlane.f32.xlu0 %v416
        %v418 = vpop.xlane.xlu0 %417
        %v419 = vsel %vm286, %v409, 0.0
        %420 = vadd.xlane.f32.xlu0 %v419
        %v421 = vpop.xlane.xlu0 %420
        %v422 = vsel %vm286, %v410, 0.0
        %423 = vadd.xlane.f32.xlu0 %v422
        %v424 = vpop.xlane.xlu0 %423
        %vm425 = vcmp.eq.s32.totalorder %v196, 2
        %vm426 = vcmp.eq.s32.totalorder %v197, 2
        %v427 = vsel %vm425, 1, 0
        %v428 = vsel %vm426, 1, 0
        %v429 = vcvt.s32.f32 %v427
        %v430 = vcvt.s32.f32 %v428
        %v431 = vmul.f32 %v190, %v429
        %v432 = vmul.f32 %v194, %v430
        %v433 = vsel %vm286, %v431, 0.0
        %v434 = vsel %vm286, %v432, 0.0
        %v435 = vadd.f32 %v433, %v434
        %436 = vadd.xlane.f32.xlu0 %v435
        %v437 = vpop.xlane.xlu0 %436
        %v438 = vrot.slane %v437, 4
        %v439 = vadd.f32 %v437, %v438
        %v440 = vrot.slane %v439, 2
        %v441 = vadd.f32 %v439, %v440
        %v442 = vrot.slane %v441, 1
        %v443 = vadd.f32 %v441, %v442
        %s444 = vtos %v443
        %s445 = sadd.f32 %s340, %s444
        %v446 = vmul.f32 %v263, %v277
        %v447 = vmul.f32 %v265, %v279
        %s448 = sld [smem:[#allocation3 + $0x2]]
        %v449 = vmul.f32 %v446, %v429
        %v450 = vmul.f32 %v447, %v430
        %v451 = vsel %vm286, %v449, 0.0
        %v452 = vsel %vm286, %v450, 0.0
        %v453 = vadd.f32 %v451, %v452
        %454 = vadd.xlane.f32.xlu0 %v453
        %v455 = vpop.xlane.xlu0 %454
        %v456 = vrot.slane %v455, 4
        %v457 = vadd.f32 %v455, %v456
        %v458 = vrot.slane %v457, 2
        %v459 = vadd.f32 %v457, %v458
        %v460 = vrot.slane %v459, 1
        %v461 = vadd.f32 %v459, %v460
        %s462 = vtos %v461
        %s463 = sadd.f32 %s448, %s462
        %s464 = scalar_lea.smem [#allocation3], 2
        %465 = sst [smem:[%s464]] %s463
        %s466 = sld [smem:[#allocation4 + $0x2]]
        %v467 = vsel %vm286, %v446, 0.0
        %v468 = vsel %vm286, %v447, 0.0
        %v469 = vadd.f32 %v467, %v468
        %470 = vadd.xlane.f32.xlu0 %v469
        %v471 = vpop.xlane.xlu0 %470
        %v472 = vrot.slane %v471, 4
        %v473 = vadd.f32 %v471, %v472
        %v474 = vrot.slane %v473, 2
        %v475 = vadd.f32 %v473, %v474
        %v476 = vrot.slane %v475, 1
        %v477 = vadd.f32 %v475, %v476
        %s478 = vtos %v477
        %s479 = sadd.f32 %s466, %s478
        %s480 = scalar_lea.smem [#allocation4], 2
        %481 = sst [smem:[%s480]] %s479
        %s482 = sld [smem:[#allocation5 + $0x2]]
        %v483 = vsel %vm286, %v429, 0.0
        %v484 = vsel %vm286, %v430, 0.0
        %v485 = vadd.f32 %v483, %v484
        %486 = vadd.xlane.f32.xlu0 %v485
        %v487 = vpop.xlane.xlu0 %486
        %v488 = vrot.slane %v487, 4
        %v489 = vadd.f32 %v487, %v488
        %v490 = vrot.slane %v489, 2
        %v491 = vadd.f32 %v489, %v490
        %v492 = vrot.slane %v491, 1
        %v493 = vadd.f32 %v491, %v492
        %s494 = vtos %v493
        %s495 = sadd.f32 %s482, %s494
        %s496 = scalar_lea.smem [#allocation5], 2
        %497 = sst [smem:[%s496]] %s495
        %vm498 = vcmp.eq.s32.totalorder %v244, 2
        %vm499 = vcmp.eq.s32.totalorder %v245, 2
        %vm500 = vmxor %vm425, 1
        %vm501 = vmxor %vm426, 1
        %vm502 = vmand %vm498, %vm500
        %vm503 = vmand %vm499, %vm501
        %v504 = vsel %vm502, 1, 0
        %v505 = vsel %vm503, 1, 0
        %v506 = vcvt.s32.f32 %v504
        %v507 = vcvt.s32.f32 %v505
        %vm508 = vmxor %vm498, 1
        %vm509 = vmxor %vm499, 1
        %vm510 = vmand %vm508, %vm425
        %vm511 = vmand %vm509, %vm426
        %v512 = vsel %vm510, 1, 0
        %v513 = vsel %vm511, 1, 0
        %v514 = vcvt.s32.f32 %v512
        %v515 = vcvt.s32.f32 %v513
        %v516 = vmul.f32 %v190, %v506
        %v517 = vmul.f32 %v194, %v507
        %v518 = vsel %vm286, %v516, 0.0
        %519 = vadd.xlane.f32.xlu0 %v518
        %v520 = vpop.xlane.xlu0 %519
        %v521 = vsel %vm286, %v517, 0.0
        %522 = vadd.xlane.f32.xlu0 %v521
        %v523 = vpop.xlane.xlu0 %522
        %v524 = vsel %vm286, %v514, 0.0
        %525 = vadd.xlane.f32.xlu0 %v524
        %v526 = vpop.xlane.xlu0 %525
        %v527 = vsel %vm286, %v515, 0.0
        %528 = vadd.xlane.f32.xlu0 %v527
        %v529 = vpop.xlane.xlu0 %528
        %vm530 = vcmp.eq.s32.totalorder %v196, 3
        %vm531 = vcmp.eq.s32.totalorder %v197, 3
        %v532 = vsel %vm530, 1, 0
        %v533 = vsel %vm531, 1, 0
        %v534 = vcvt.s32.f32 %v532
        %v535 = vcvt.s32.f32 %v533
        %v536 = vmul.f32 %v191, %v534
        %v537 = vmul.f32 %v195, %v535
        %v538 = vsel %vm286, %v536, 0.0
        %v539 = vsel %vm286, %v537, 0.0
        %v540 = vadd.f32 %v538, %v539
        %541 = vadd.xlane.f32.xlu0 %v540
        %v542 = vpop.xlane.xlu0 %541
        %v543 = vrot.slane %v542, 4
        %v544 = vadd.f32 %v542, %v543
        %v545 = vrot.slane %v544, 2
        %v546 = vadd.f32 %v544, %v545
        %v547 = vrot.slane %v546, 1
        %v548 = vadd.f32 %v546, %v547
        %s549 = vtos %v548
        %s550 = sadd.f32 %s445, %s549
        %v551 = vmul.f32 %v271, %v277
        %v552 = vmul.f32 %v273, %v279
        %s553 = sld [smem:[#allocation3 + $0x3]]
        %v554 = vmul.f32 %v551, %v534
        %v555 = vmul.f32 %v552, %v535
        %v556 = vsel %vm286, %v554, 0.0
        %v557 = vsel %vm286, %v555, 0.0
        %v558 = vadd.f32 %v556, %v557
        %559 = vadd.xlane.f32.xlu0 %v558
        %v560 = vpop.xlane.xlu0 %559
        %v561 = vrot.slane %v560, 4
        %v562 = vadd.f32 %v560, %v561
        %v563 = vrot.slane %v562, 2
        %v564 = vadd.f32 %v562, %v563
        %v565 = vrot.slane %v564, 1
        %v566 = vadd.f32 %v564, %v565
        %s567 = vtos %v566
        %s568 = sadd.f32 %s553, %s567
        %s569 = scalar_lea.smem [#allocation3], 3
        %570 = sst [smem:[%s569]] %s568
        %s571 = sld [smem:[#allocation4 + $0x3]]
        %v572 = vsel %vm286, %v551, 0.0
        %v573 = vsel %vm286, %v552, 0.0
        %v574 = vadd.f32 %v572, %v573
        %575 = vadd.xlane.f32.xlu0 %v574
        %v576 = vpop.xlane.xlu0 %575
        %v577 = vrot.slane %v576, 4
        %v578 = vadd.f32 %v576, %v577
        %v579 = vrot.slane %v578, 2
        %v580 = vadd.f32 %v578, %v579
        %v581 = vrot.slane %v580, 1
        %v582 = vadd.f32 %v580, %v581
        %s583 = vtos %v582
        %s584 = sadd.f32 %s571, %s583
        %s585 = scalar_lea.smem [#allocation4], 3
        %586 = sst [smem:[%s585]] %s584
        %s587 = sld [smem:[#allocation5 + $0x3]]
        %v588 = vsel %vm286, %v534, 0.0
        %v589 = vsel %vm286, %v535, 0.0
        %v590 = vadd.f32 %v588, %v589
        %591 = vadd.xlane.f32.xlu0 %v590
        %v592 = vpop.xlane.xlu0 %591
        %v593 = vrot.slane %v592, 4
        %v594 = vadd.f32 %v592, %v593
        %v595 = vrot.slane %v594, 2
        %v596 = vadd.f32 %v594, %v595
        %v597 = vrot.slane %v596, 1
        %v598 = vadd.f32 %v596, %v597
        %s599 = vtos %v598
        %s600 = sadd.f32 %s587, %s599
        %s601 = scalar_lea.smem [#allocation5], 3
        %602 = sst [smem:[%s601]] %s600
        %vm603 = vcmp.eq.s32.totalorder %v244, 3
        %vm604 = vcmp.eq.s32.totalorder %v245, 3
        %vm605 = vmxor %vm530, 1
        %vm606 = vmxor %vm531, 1
        %vm607 = vmand %vm603, %vm605
        %vm608 = vmand %vm604, %vm606
        %v609 = vsel %vm607, 1, 0
        %v610 = vsel %vm608, 1, 0
        %v611 = vcvt.s32.f32 %v609
        %v612 = vcvt.s32.f32 %v610
        %vm613 = vmxor %vm603, 1
        %vm614 = vmxor %vm604, 1
        %vm615 = vmand %vm613, %vm530
        %vm616 = vmand %vm614, %vm531
        %v617 = vsel %vm615, 1, 0
        %v618 = vsel %vm616, 1, 0
        %v619 = vcvt.s32.f32 %v617
        %v620 = vcvt.s32.f32 %v618
        %v621 = vmul.f32 %v191, %v611
        %v622 = vmul.f32 %v195, %v612
        %v623 = vsel %vm286, %v621, 0.0
        %624 = vadd.xlane.f32.xlu0 %v623
        %v625 = vpop.xlane.xlu0 %624
        %v626 = vsel %vm286, %v622, 0.0
        %627 = vadd.xlane.f32.xlu0 %v626
        %v628 = vpop.xlane.xlu0 %627
        %v629 = vsel %vm286, %v619, 0.0
        %630 = vadd.xlane.f32.xlu0 %v629
        %v631 = vpop.xlane.xlu0 %630
        %v632 = vsel %vm286, %v620, 0.0
        %633 = vadd.xlane.f32.xlu0 %v632
        %v634 = vpop.xlane.xlu0 %633
        %s635 = sld [smem:[#allocation2]]
        %s636 = ssub.f32 %s298, %s550
        %s637 = sadd.f32 %s635, %s636
        %s638 = scalar_lea.smem [#allocation2], 0
        %639 = sst [smem:[%s638]] %s637
        %v642 = vlaneseq
        %v643 = vand.u32 %v642, 127
        %v644 = vlaneseq
        %v645 = vshrl.u32 %v644, 7
        %v646 = vsub.s32 %v643, %v645
        %v647 = vrot.slane %v415, %v646
        %v648 = vlaneseq
        %v649 = vshrl.u32 %v648, 7
        %v650 = vsub.s32 %v643, %v649
        %v651 = vrot.slane %v418, %v650
        %vm652 = vcmask 1041409
        %v653 = vsel %vm652, %v651, %v647
        %v657 = vlaneseq
        %v658 = vshrl.u32 %v657, 7
        %v659 = vsub.s32 %v643, %v658
        %v660 = vrot.slane %v520, %v659
        %v661 = vlaneseq
        %v662 = vshrl.u32 %v661, 7
        %v663 = vsub.s32 %v643, %v662
        %v664 = vrot.slane %v523, %v663
        %vm665 = vcmask 1043459
        %v666 = vsel %vm665, %v664, %v660
        %v670 = vlaneseq
        %v671 = vshrl.u32 %v670, 7
        %v672 = vsub.s32 %v643, %v671
        %v673 = vrot.slane %v625, %v672
        %v674 = vlaneseq
        %v675 = vshrl.u32 %v674, 7
        %v676 = vsub.s32 %v643, %v675
        %v677 = vrot.slane %v628, %v676
        %vm678 = vcmask 1045509
        %v679 = vsel %vm678, %v677, %v673
        %vm681 = vcmask 1041408
        %v682 = vsel %vm681, %v653, %v666
        %vm683 = vcmask 1043456
        %v684 = vsel %vm683, %v682, %v679
        %vm685 = vcmask 1045504
        %v686 = vsel %vm685, %v684, 0.0
        %v689 = vlaneseq
        %v690 = vshrl.u32 %v689, 7
        %v691 = vsub.s32 %v643, %v690
        %v692 = vrot.slane %v421, %v691
        %v693 = vlaneseq
        %v694 = vshrl.u32 %v693, 7
        %v695 = vsub.s32 %v643, %v694
        %v696 = vrot.slane %v424, %v695
        %v697 = vsel %vm652, %v696, %v692
        %v701 = vlaneseq
        %v702 = vshrl.u32 %v701, 7
        %v703 = vsub.s32 %v643, %v702
        %v704 = vrot.slane %v526, %v703
        %v705 = vlaneseq
        %v706 = vshrl.u32 %v705, 7
        %v707 = vsub.s32 %v643, %v706
        %v708 = vrot.slane %v529, %v707
        %v709 = vsel %vm665, %v708, %v704
        %v713 = vlaneseq
        %v714 = vshrl.u32 %v713, 7
        %v715 = vsub.s32 %v643, %v714
        %v716 = vrot.slane %v631, %v715
        %v717 = vlaneseq
        %v718 = vshrl.u32 %v717, 7
        %v719 = vsub.s32 %v643, %v718
        %v720 = vrot.slane %v634, %v719
        %v721 = vsel %vm678, %v720, %v716
        %v723 = vsel %vm681, %v697, %v709
        %v724 = vsel %vm683, %v723, %v721
        %v725 = vsel %vm685, %v724, 0.0
        %s726 = smul.u32 %s20, 8
        %727 = vxpose.xlu0.b32.start [1/16] %v686, 128
        %728 = vxpose.xlu0.b32.cont [2/16] 0.0, 128
        %729 = vxpose.xlu0.b32.cont [3/16] 0.0, 128
        %730 = vxpose.xlu0.b32.cont [4/16] 0.0, 128
        %731 = vxpose.xlu0.b32.cont [5/16] 0.0, 128
        %732 = vxpose.xlu0.b32.cont [6/16] 0.0, 128
        %733 = vxpose.xlu0.b32.cont [7/16] 0.0, 128
        %734 = vxpose.xlu0.b32.cont [8/16] 0.0, 128
        %735 = vxpose.xlu0.b32.cont [9/16] 0.0, 128
        %736 = vxpose.xlu0.b32.cont [10/16] 0.0, 128
        %737 = vxpose.xlu0.b32.cont [11/16] 0.0, 128
        %738 = vxpose.xlu0.b32.cont [12/16] 0.0, 128
        %739 = vxpose.xlu0.b32.cont [13/16] 0.0, 128
        %740 = vxpose.xlu0.b32.cont [14/16] 0.0, 128
        %741 = vxpose.xlu0.b32.cont [15/16] 0.0, 128
        %742 = vxpose.xlu0.b32.end [16/16] 0.0, 128
        %v743 = vpop.trf.xlu0
        %v744 = vpop.trf.xlu0
        %v745 = vpop.trf.xlu0
        %v746 = vpop.trf.xlu0
        %v747 = vpop.trf.xlu0
        %v748 = vpop.trf.xlu0
        %v749 = vpop.trf.xlu0
        %v750 = vpop.trf.xlu0
        %v751 = vpop.trf.xlu0
        %v752 = vpop.trf.xlu0
        %v753 = vpop.trf.xlu0
        %v754 = vpop.trf.xlu0
        %v755 = vpop.trf.xlu0
        %v756 = vpop.trf.xlu0
        %v757 = vpop.trf.xlu0
        %v758 = vpop.trf.xlu0
        %s759 = scalar_lea.vmem [#allocation6], %s726
        %vm760 = vcmask 64512
        %761 = vst.msk [vmem:[%s759] sm:$0xff] %vm760, %v743
        %762 = vxpose.xlu0.b32.start [1/16] %v725, 128
        %763 = vxpose.xlu0.b32.cont [2/16] 0.0, 128
        %764 = vxpose.xlu0.b32.cont [3/16] 0.0, 128
        %765 = vxpose.xlu0.b32.cont [4/16] 0.0, 128
        %766 = vxpose.xlu0.b32.cont [5/16] 0.0, 128
        %767 = vxpose.xlu0.b32.cont [6/16] 0.0, 128
        %768 = vxpose.xlu0.b32.cont [7/16] 0.0, 128
        %769 = vxpose.xlu0.b32.cont [8/16] 0.0, 128
        %770 = vxpose.xlu0.b32.cont [9/16] 0.0, 128
        %771 = vxpose.xlu0.b32.cont [10/16] 0.0, 128
        %772 = vxpose.xlu0.b32.cont [11/16] 0.0, 128
        %773 = vxpose.xlu0.b32.cont [12/16] 0.0, 128
        %774 = vxpose.xlu0.b32.cont [13/16] 0.0, 128
        %775 = vxpose.xlu0.b32.cont [14/16] 0.0, 128
        %776 = vxpose.xlu0.b32.cont [15/16] 0.0, 128
        %777 = vxpose.xlu0.b32.end [16/16] 0.0, 128
        %v778 = vpop.trf.xlu0
        %v779 = vpop.trf.xlu0
        %v780 = vpop.trf.xlu0
        %v781 = vpop.trf.xlu0
        %v782 = vpop.trf.xlu0
        %v783 = vpop.trf.xlu0
        %v784 = vpop.trf.xlu0
        %v785 = vpop.trf.xlu0
        %v786 = vpop.trf.xlu0
        %v787 = vpop.trf.xlu0
        %v788 = vpop.trf.xlu0
        %v789 = vpop.trf.xlu0
        %v790 = vpop.trf.xlu0
        %v791 = vpop.trf.xlu0
        %v792 = vpop.trf.xlu0
        %v793 = vpop.trf.xlu0
        %s794 = scalar_lea.vmem [#allocation7], %s726
        %795 = vst.msk [vmem:[%s794] sm:$0xff] %vm760, %v778
        %p796 = scmp.eq.s32.totalorder %s20, 1
        // Predicated region
        $region41: #{dc_and_lc_loss.1} parent=27 // pred_check
          %p797 = pneg %p796
        $region42: #{dc_and_lc_loss.1} parent=27 // pred_check_branch
          %799 = sbr.rel (%p797) target = $region44
        $region43: #{dc_and_lc_loss.1} parent=27 // pred_region
          %s800 = sld [smem:[#allocation2]]
          %v801 = vrcp.pop 512.0
          %s802 = vtos %v801
          %s803 = smul.f32 %s800, %s802
          %s804 = sld [smem:[#allocation3 + $0x1]]
          %s805 = smul.f32 %s804, 2.0
          %s806 = sadd.f32 %s805, 1e-05
          %s807 = sld [smem:[#allocation4 + $0x1]]
          %s808 = sld [smem:[#allocation5 + $0x1]]
          %s809 = sadd.f32 %s807, %s808
          %s810 = sadd.f32 %s809, 1e-05
          %s811 = sadd.f32 %s810, 1e-08
          %v812 = vstv %s811
          %v813 = vrcp.pop %v812
          %s814 = vtos %v813
          %s815 = smul.f32 %s806, %s814
          %s816 = sadd.f32 %s815, 0.0
          %s817 = sld [smem:[#allocation3 + $0x2]]
          %s818 = smul.f32 %s817, 2.0
          %s819 = sadd.f32 %s818, 1e-05
          %s820 = sld [smem:[#allocation4 + $0x2]]
          %s821 = sld [smem:[#allocation5 + $0x2]]
          %s822 = sadd.f32 %s820, %s821
          %s823 = sadd.f32 %s822, 1e-05
          %s824 = sadd.f32 %s823, 1e-08
          %v825 = vstv %s824
          %v826 = vrcp.pop %v825
          %s827 = vtos %v826
          %s828 = smul.f32 %s819, %s827
          %s829 = sadd.f32 %s816, %s828
          %s830 = sld [smem:[#allocation3 + $0x3]]
          %s831 = smul.f32 %s830, 2.0
          %s832 = sadd.f32 %s831, 1e-05
          %s833 = sld [smem:[#allocation4 + $0x3]]
          %s834 = sld [smem:[#allocation5 + $0x3]]
          %s835 = sadd.f32 %s833, %s834
          %s836 = sadd.f32 %s835, 1e-05
          %s837 = sadd.f32 %s836, 1e-08
          %v838 = vstv %s837
          %v839 = vrcp.pop %v838
          %s840 = vtos %v839
          %s841 = smul.f32 %s832, %s840
          %s842 = sadd.f32 %s829, %s841
          %v843 = vrcp.pop 3.0
          %s844 = vtos %v843
          %s845 = smul.f32 %s842, %s844
          %s846 = ssub.f32 0.0, %s845
          %v847 = vld [vmem:[#allocation6] sm:$0xff]
          %v848 = vld [vmem:[#allocation6 + $0x8] sm:$0xff]
          %v849 = vld [vmem:[#allocation7] sm:$0xff]
          %v850 = vld [vmem:[#allocation7 + $0x8] sm:$0xff]
          %v851 = vsel %vm760, %v847, 0.0
          %v852 = vsel %vm760, %v848, 0.0
          %v853 = vadd.f32 %v851, %v852
          %v854 = vrot.slane %v853, 4
          %v855 = vadd.f32 %v853, %v854
          %v856 = vrot.slane %v855, 2
          %v857 = vadd.f32 %v855, %v856
          %v858 = vrot.slane %v857, 1
          %v859 = vadd.f32 %v857, %v858
          %v860 = vsel %vm760, %v849, 0.0
          %v861 = vsel %vm760, %v850, 0.0
          %v862 = vadd.f32 %v860, %v861
          %v863 = vrot.slane %v862, 4
          %v864 = vadd.f32 %v862, %v863
          %v865 = vrot.slane %v864, 2
          %v866 = vadd.f32 %v864, %v865
          %v867 = vrot.slane %v866, 1
          %v868 = vadd.f32 %v866, %v867
          %v869 = vadd.f32 %v859, 1e-05
          %v870 = vrcp.pop %v869
          %v871 = vmul.f32 %v847, %v870
          %v872 = vmul.f32 %v848, %v870
          %v873 = vadd.f32 %v868, 1e-05
          %v874 = vrcp.pop %v873
          %v875 = vmul.f32 %v849, %v874
          %v876 = vmul.f32 %v850, %v874
          %v877 = vsub.f32 %v871, %v875
          %v878 = vsub.f32 %v872, %v876
          %v879 = vlaneseq
          %v880 = vshrl.u32 %v879, 7
          %v881 = vadd.s32 %v880, 8
          %vm882 = vcmp.ge.s32.totalorder %v880, %v643
          %vm883 = vcmp.ge.s32.totalorder %v881, %v643
          %v884 = vsel %vm882, 1, 0
          %v885 = vsel %vm883, 1, 0
          %v886 = vcvt.s32.f32 %v884
          %v887 = vcvt.s32.f32 %v885
          %v889 = vsel %vm286, %v886, 0
          %v892 = vsel %vm286, %v887, 0
          %894 = vmatprep.subr.mxu0 0.0
          %895 = vmatpush1.msra.mxu0 %v877
          %896 = vmatprep.subr.mxu0 0.0
          %897 = vmatpush1.msra.mxu0 %v878
          %898 = vmatprep.subr.mxu0 0.0
          %899 = vmatpush1.msra.mxu0 0.0
          %900 = vmatprep.subr.mxu0 0.0
          %901 = vmatpush1.msra.mxu0 0.0
          %902 = vmatprep.subr.mxu0 0.0
          %903 = vmatpush1.msra.mxu0 0.0
          %904 = vmatprep.subr.mxu0 0.0
          %905 = vmatpush1.msra.mxu0 0.0
          %906 = vmatprep.subr.mxu0 0.0
          %907 = vmatpush1.msra.mxu0 0.0
          %908 = vmatprep.subr.mxu0 0.0
          %909 = vmatpush1.msra.mxu0 0.0
          %910 = vmatprep.subr.mxu0 0.0
          %911 = vmatpush1.msra.mxu0 0.0
          %912 = vmatprep.subr.mxu0 0.0
          %913 = vmatpush1.msra.mxu0 0.0
          %914 = vmatprep.subr.mxu0 0.0
          %915 = vmatpush1.msra.mxu0 0.0
          %916 = vmatprep.subr.mxu0 0.0
          %917 = vmatpush1.msra.mxu0 0.0
          %918 = vmatprep.subr.mxu0 0.0
          %919 = vmatpush1.msra.mxu0 0.0
          %920 = vmatprep.subr.mxu0 0.0
          %921 = vmatpush1.msra.mxu0 0.0
          %922 = vmatprep.subr.mxu0 0.0
          %923 = vmatpush1.msra.mxu0 0.0
          %924 = vmatprep.subr.mxu0 0.0
          %925 = vmatpush1.msra.mxu0 0.0
          %926 = vmatprep.subr.mxu0 0.0
          %927 = vmatpush1.msra.mxu0 0.0
          %928 = vmatprep.subr.mxu0 0.0
          %929 = vmatpush1.msra.mxu0 0.0
          %930 = vmatprep.subr.mxu0 0.0
          %931 = vmatpush1.msra.mxu0 0.0
          %932 = vmatprep.subr.mxu0 0.0
          %933 = vmatpush1.msra.mxu0 0.0
          %934 = vmatprep.subr.mxu0 0.0
          %935 = vmatpush1.msra.mxu0 0.0
          %936 = vmatprep.subr.mxu0 0.0
          %937 = vmatpush1.msra.mxu0 0.0
          %938 = vmatprep.subr.mxu0 0.0
          %939 = vmatpush1.msra.mxu0 0.0
          %940 = vmatprep.subr.mxu0 0.0
          %941 = vmatpush1.msra.mxu0 0.0
          %942 = vmatprep.subr.mxu0 0.0
          %943 = vmatpush1.msra.mxu0 0.0
          %944 = vmatprep.subr.mxu0 0.0
          %945 = vmatpush1.msra.mxu0 0.0
          %946 = vmatprep.subr.mxu0 0.0
          %947 = vmatpush1.msra.mxu0 0.0
          %948 = vmatprep.subr.mxu0 0.0
          %949 = vmatpush1.msra.mxu0 0.0
          %950 = vmatprep.subr.mxu0 0.0
          %951 = vmatpush1.msra.mxu0 0.0
          %952 = vmatprep.subr.mxu0 0.0
          %953 = vmatpush1.msra.mxu0 0.0
          %954 = vmatprep.subr.mxu0 0.0
          %955 = vmatpush1.msra.mxu0 0.0
          %956 = vmatprep.subr.mxu0 0.0
          %957 = vmatpush1.msra.mxu0 0.0
          %958 = vmatprep.mubr.f32.mxu0 0.0
          %959 = vmatmul.mubr.f32.gmra.mrb[0].mxu0 %v889
          %v960 = vpop.f32.mrb[0].mxu0
          %v961 = vadd.f32 0.0, %v960
          %v962 = vpop.f32.mrb[0].mxu0
          %963 = vmatprep.mubr.f32.mxu0 0.0
          %964 = vmatmul.mubr.f32.gmra.mrb[0].mxu0 %v892
          %v965 = vpop.f32.mrb[0].mxu0
          %v966 = vadd.f32 0.0, %v965
          %v967 = vpop.f32.mrb[0].mxu0
          %968 = vdwg.mxu0
          %v969 = vand.u32 2147483647, %v961
          %v970 = vand.u32 2147483647, %v966
          %v971 = vsel %vm760, %v969, 0.0
          %v972 = vsel %vm760, %v970, 0.0
          %v973 = vadd.f32 %v971, %v972
          %974 = vadd.xlane.f32.xlu0 %v973
          %v975 = vpop.xlane.xlu0 %974
          %v976 = vrot.slane %v975, 4
          %v977 = vadd.f32 %v975, %v976
          %v978 = vrot.slane %v977, 2
          %v979 = vadd.f32 %v977, %v978
          %v980 = vrot.slane %v979, 1
          %v981 = vadd.f32 %v979, %v980
          %s982 = vtos %v981
          %v983 = vrcp.pop 96.0
          %s984 = vtos %v983
          %s985 = smul.f32 %s982, %s984
          %s986 = smul.f32 %s985, 4.0
          %v987 = vadd.f32 %v859, %v868
          %v988 = vand.u32 2147483647, %v987
          %vm989 = vcmask 57344
          %v990 = vsel %vm989, %v988, 0.0
          %991 = vadd.xlane.f32.xlu0 %v990
          %v992 = vpop.xlane.xlu0 %991
          %v993 = vrot.slane %v992, 4
          %v994 = vadd.f32 %v992, %v993
          %v995 = vrot.slane %v994, 2
          %v996 = vadd.f32 %v994, %v995
          %v997 = vrot.slane %v996, 1
          %v998 = vadd.f32 %v996, %v997
          %s999 = vtos %v998
          %v1000 = vrcp.pop 256.0
          %s1001 = vtos %v1000
          %s1002 = smul.f32 %s999, %s1001
          %v1003 = vrcp.pop 6.0
          %s1004 = vtos %v1003
          %s1005 = smul.f32 %s1002, %s1004
          %s1006 = smul.f32 %s1005, 0.1
          %s1007 = sadd.f32 %s986, %s1006
          %s1008 = sadd.f32 %s803, %s846
          %s1009 = smul.f32 %s1007, 0.01
          %s1010 = sadd.f32 %s1008, %s1009
          %s1011 = scalar_lea.smem [#allocation13], 0
          %1012 = sst [smem:[%s1011]] %s1010
        $region44: #{dc_and_lc_loss.1} parent=27 // pred_fallthru
          _
        // Predicated region
        $region45: #{dc_and_lc_loss.1} parent=27 // pred_check
          %p1013 = pneg %p85
        $region46: #{dc_and_lc_loss.1} parent=27 // pred_check_branch
          %1015 = sbr.rel (%p1013) target = $region48
        $region47: #{dc_and_lc_loss.1} parent=27 // pred_region
          %s1017 = ssub.s32 16, 16
          %1018 = vsyncadd [#allocation10], %s1017
          %1021 = dma.smem_to_hbm [#allocation13], 16, %s2, [#allocation10]
        $region48: #{dc_and_lc_loss.1} parent=27 // pred_fallthru
          _
        // Predicated region
        $region49: #{dc_and_lc_loss.1} parent=27 // pred_check
          %p1022 = pneg %p85
        $region50: #{dc_and_lc_loss.1} parent=27 // pred_check_branch
          %1024 = sbr.rel (%p1022) target = $region52
        $region51: #{dc_and_lc_loss.1} parent=27 // pred_region
          %1025 = dma.done [#allocation10], 16
        $region52: #{dc_and_lc_loss.1} parent=27 // pred_fallthru
          _
        %1026 = sfence
      $region28: #{dc_and_lc_loss.1} parent=5 // pred_fallthru
        _
      %p1027 = scmp.le.s32.totalorder 2, %s15
      // Predicated region
      $region53: #{dc_and_lc_loss.1} parent=5 // pred_check
        %p1028 = pneg %p1027
      $region54: #{dc_and_lc_loss.1} parent=5 // pred_check_branch
        %1030 = sbr.rel (%p1028) target = $region56
      $region55: #{dc_and_lc_loss.1} parent=5 // pred_region
        %s1031 = ssub.s32 %s15, 2
      $region56: #{dc_and_lc_loss.1} parent=5 // pred_fallthru
        _
    $region6: #{dc_and_lc_loss.1} parent=1 // loop_footer
      %s19 = sadd.s32 1, %s15
    $region7: #{dc_and_lc_loss.1} parent=1 // loop_footer_branch
      %14 = sbr.rel target = $region3
    $region8: #{dc_and_lc_loss.1} parent=1 // loop_exit
      _
    %1032 = vsyncpa [#allocation9], 1
    %s1033 = scalar_lea.sflag [#allocation9], 1
    %1034 = vsyncpa %s1033, 1
    %1035 = vsyncpa [#allocation12], 1
    %s1036 = scalar_lea.sflag [#allocation12], 1
    %1037 = vsyncpa %s1036, 1
    %1038 = vsyncpa [#allocation10], 1
    %s1039 = scalar_lea.sflag [#allocation10], 1
    %1040 = vsyncpa %s1039, 1

</llo_original>
